<compile_context>
chip_gen: v6e
topology: v6e:2x2x1
jax: 0.10.0
libtpu: 0.0.40
codegen_flags: <defaults>
</compile_context>

<pallas_src>
import jax
import jax.numpy as jnp
from jax.experimental import pallas as pl
from jax.experimental.pallas import tpu as pltpu


def _bar_kernel(x_ref, lg_ref,
                w1_ref, b1_ref, s1_ref, o1_ref,
                w2b_ref, b2b_ref, w2r_ref, b2r_ref,
                out_ref):
    # Per-grid-step view: one batch element, TN points, channels-first.
    x = x_ref[...]            # [D,  TN] f32
    lg = lg_ref[...]          # [C,  TN] f32

    # ---- entropy of softmax(logits) over the channel (sublane) axis --------
    m = jnp.max(lg, axis=0, keepdims=True)                       # [1, TN]
    z = lg - m
    ez = jnp.exp(z)
    ssum = jnp.sum(ez, axis=0, keepdims=True)                    # [1, TN]
    inv = pl.reciprocal(ssum, approx=False)   # approx=True can flip the hard mask near 0.5
    entropy = jnp.log(ssum) - jnp.sum(ez * z, axis=0, keepdims=True) * inv  # [1, TN]

    # ---- fused first layer of both branches: [D/2 + 2D, D] @ [D, TN] -------
    h = jnp.dot(w1_ref[...], x, preferred_element_type=jnp.float32)
    h = (h + b1_ref[...]) * s1_ref[...] + o1_ref[...]            # folded BN
    h = jnp.maximum(h, 0.0)                                      # [D/2 + 2D, TN]

    dh = w2b_ref.shape[0]                                        # D // 2 (static)
    h1 = h[:dh]                                                  # boundary branch
    h2 = h[dh:]                                                  # refine branch

    # ---- boundary score: VPU multiply + sublane reduce (no 1-wide MXU pass)
    bscore = jnp.sum(h1 * w2b_ref[...], axis=0, keepdims=True) + b2b_ref[...]
    bprob = jax.nn.sigmoid(bscore)                               # [1, TN]

    # ---- refine second layer: [D, 2D] @ [2D, TN] ---------------------------
    refined = jnp.dot(w2r_ref[...], h2,
                      preferred_element_type=jnp.float32) + b2r_ref[...]     # [D, TN]

    # ---- boundary-aware mix -------------------------------------------------
    mask = (bprob + 0.3 * entropy) > 0.5                         # [1, TN] -> bcast over D
    out_ref[...] = jnp.where(mask, x + 0.5 * refined, x)


def boundary_aware_refinement(features, semantic_logits, params, *, tn=512):
    """features: [B, N, D] f32, semantic_logits: [B, N, C] f32 -> [B, N, D]."""
    B, N, D = features.shape
    _, _, C = semantic_logits.shape
    (w1, b1, s1, o1, w2b, b2b, w2r, b2r) = params

    TN = min(tn, N)
    assert TN % 128 == 0 and N % TN == 0, "N must be a multiple of the 128-aligned tile"
    grid = (B, N // TN)

    # Lane-dense, channels-first layout for the kernel.
    x_t = jnp.transpose(features, (0, 2, 1))             # [B, D, N]
    lg_t = jnp.transpose(semantic_logits, (0, 2, 1))     # [B, C, N]

    def full(a):
        return pl.BlockSpec(a.shape, lambda b, n, _nd=a.ndim: (0,) * _nd)

    out_t = pl.pallas_call(
        _bar_kernel,
        out_shape=jax.ShapeDtypeStruct((B, D, N), jnp.float32),
        grid_spec=pltpu.PrefetchScalarGridSpec(
            num_scalar_prefetch=0,
            grid=grid,
            in_specs=[
                pl.BlockSpec((None, D, TN), lambda b, n: (b, 0, n)),   # features (squeezed B)
                pl.BlockSpec((None, C, TN), lambda b, n: (b, 0, n)),   # logits   (squeezed B)
                full(w1), full(b1), full(s1), full(o1),
                full(w2b), full(b2b), full(w2r), full(b2r),
            ],
            out_specs=pl.BlockSpec((None, D, TN), lambda b, n: (b, 0, n)),
        ),
        compiler_params=pltpu.CompilerParams(
            dimension_semantics=("parallel", "parallel"),
            vmem_limit_bytes=32 * 1024 * 1024),        # well under v7x's 64 MiB physical VMEM
        input_output_aliases={0: 0},                   # donate channels-first features buffer
    )(x_t, lg_t, w1, b1, s1, o1, w2b, b2b, w2r, b2r)

    return jnp.transpose(out_t, (0, 2, 1))             # back to [B, N, D]


def init_params(key, feature_dim):
    """Deterministic init matching the PyTorch module's parameter shapes.

    Conv1d(k=1) weights [out, in, 1] are stored as [out, in] (channels-first
    matmul W @ X).  BatchNorm1d folded with fresh-init eval stats
    (mean=0, var=1, gamma=1, beta=0) -> per-channel scale/bias columns.
    The two first-layer weights/biases are concatenated (fused GEMM) and the
    1-wide boundary head weight is stored as a [D/2, 1] column for the
    VPU-multiply + sublane-reduce path.
    """
    D = feature_dim
    Dh = D // 2
    D2 = D * 2
    eps = 1e-5
    ks = jax.random.split(key, 8)

    def conv_w(k, in_c, out_c):                 # [out, in]
        bound = 1.0 / jnp.sqrt(in_c)
        return jax.random.uniform(k, (out_c, in_c), jnp.float32, -bound, bound)

    def conv_b(k, in_c, out_c):                 # [out, 1]
        bound = 1.0 / jnp.sqrt(in_c)
        return jax.random.uniform(k, (out_c, 1), jnp.float32, -bound, bound)

    bn_scale = lambda c: jnp.full((c, 1), 1.0 / jnp.sqrt(1.0 + eps), jnp.float32)
    bn_bias = lambda c: jnp.zeros((c, 1), jnp.float32)

    # boundary_conv
    w1b = conv_w(ks[0], D, Dh)
    b1b = conv_b(ks[1], D, Dh)
    s1b, o1b = bn_scale(Dh), bn_bias(Dh)
    w2b = conv_w(ks[2], Dh, 1)                  # [1, Dh]
    b2b = conv_b(ks[3], Dh, 1)                  # [1, 1]
    # feature_refine
    w1r = conv_w(ks[4], D, D2)
    b1r = conv_b(ks[5], D, D2)
    s1r, o1r = bn_scale(D2), bn_bias(D2)
    w2r = conv_w(ks[6], D2, D)                  # [D, 2D]
    b2r = conv_b(ks[7], D2, D)                  # [D, 1]

    # Fuse the two first-layer GEMMs (shared LHS x).
    w1 = jnp.concatenate([w1b, w1r], axis=0)    # [Dh + 2D, D]
    b1 = jnp.concatenate([b1b, b1r], axis=0)    # [Dh + 2D, 1]
    s1 = jnp.concatenate([s1b, s1r], axis=0)
    o1 = jnp.concatenate([o1b, o1r], axis=0)

    w2b_col = jnp.transpose(w2b)                # [Dh, 1]

    return (w1, b1, s1, o1, w2b_col, b2b, w2r, b2r)


def reference(features, semantic_logits, params):
    """Pure-JAX reference (channels-last) for validation."""
    (w1, b1, s1, o1, w2b, b2b, w2r, b2r) = params
    D = features.shape[-1]
    Dh = D // 2

    p = jax.nn.softmax(semantic_logits, axis=-1)
    logp = jax.nn.log_softmax(semantic_logits, axis=-1)
    entropy = -jnp.sum(p * logp, axis=-1)                           # [B, N]

    h = jnp.maximum((features @ w1.T + b1[:, 0]) * s1[:, 0] + o1[:, 0], 0.0)
    h1 = h[..., :Dh]
    h2 = h[..., Dh:]
    bprob = jax.nn.sigmoid(h1 @ w2b[:, 0] + b2b[0, 0])              # [B, N]
    refined = h2 @ w2r.T + b2r[:, 0]                                # [B, N, D]

    mask = (bprob + 0.3 * entropy) > 0.5
    return jnp.where(mask[..., None], features + 0.5 * refined, features)


if __name__ == "__main__":
    B, N, D, C = 2, 1024, 32, 8        # N tiled as 2 x 512 per batch -> grid (2, 2)
    key = jax.random.PRNGKey(0)
    k_x, k_l, k_p = jax.random.split(key, 3)

    features = jax.random.normal(k_x, (B, N, D), jnp.float32)
    semantic_logits = jax.random.normal(k_l, (B, N, C), jnp.float32)
    params = init_params(k_p, D)

    run = jax.jit(boundary_aware_refinement)
    out = jax.block_until_ready(run(features, semantic_logits, params))

    ref = reference(features, semantic_logits, params)
    assert out.shape == (B, N, D)
    assert jnp.allclose(out, ref, atol=1e-4, rtol=1e-4), "mismatch vs JAX reference"

    print("KERNEL_OK")
</pallas_src>

<mosaic_0001>
module attributes {stable_mosaic.version = 11 : i64} {
  func.func @_bar_kernel(%arg0: i32, %arg1: i32, %arg2: memref<1x32x512xf32, #tpu.memory_space<vmem>>, %arg3: memref<1x8x512xf32, #tpu.memory_space<vmem>>, %arg4: memref<80x32xf32, #tpu.memory_space<vmem>>, %arg5: memref<80x1xf32, #tpu.memory_space<vmem>>, %arg6: memref<80x1xf32, #tpu.memory_space<vmem>>, %arg7: memref<80x1xf32, #tpu.memory_space<vmem>>, %arg8: memref<16x1xf32, #tpu.memory_space<vmem>>, %arg9: memref<1x1xf32, #tpu.memory_space<vmem>>, %arg10: memref<32x64xf32, #tpu.memory_space<vmem>>, %arg11: memref<32x1xf32, #tpu.memory_space<vmem>>, %arg12: memref<1x32x512xf32, #tpu.memory_space<vmem>>) attributes {dimension_semantics = [#tpu.dimension_semantics<parallel>, #tpu.dimension_semantics<parallel>], iteration_bounds = array<i64: 2, 2>, scalar_prefetch = 0 : i64, scratch_operands = 0 : i64, tpu.core_type = #tpu.core_type<tc>, window_params = [{transform_indices = @transform_0, window_bounds = array<i64: 1, 32, 512>}, {transform_indices = @transform_1, window_bounds = array<i64: 1, 8, 512>}, {pipeline_mode = #tpu.pipeline_mode<synchronous>, transform_indices = @transform_2, window_bounds = array<i64: 80, 32>}, {pipeline_mode = #tpu.pipeline_mode<synchronous>, transform_indices = @transform_3, window_bounds = array<i64: 80, 1>}, {pipeline_mode = #tpu.pipeline_mode<synchronous>, transform_indices = @transform_4, window_bounds = array<i64: 80, 1>}, {pipeline_mode = #tpu.pipeline_mode<synchronous>, transform_indices = @transform_5, window_bounds = array<i64: 80, 1>}, {pipeline_mode = #tpu.pipeline_mode<synchronous>, transform_indices = @transform_6, window_bounds = array<i64: 16, 1>}, {pipeline_mode = #tpu.pipeline_mode<synchronous>, transform_indices = @transform_7, window_bounds = array<i64: 1, 1>}, {pipeline_mode = #tpu.pipeline_mode<synchronous>, transform_indices = @transform_8, window_bounds = array<i64: 32, 64>}, {pipeline_mode = #tpu.pipeline_mode<synchronous>, transform_indices = @transform_9, window_bounds = array<i64: 32, 1>}, {transform_indices = @transform_10, window_bounds = array<i64: 1, 32, 512>}]} {
    %c0 = arith.constant 0 : index
    %c0_0 = arith.constant 0 : index
    %c0_1 = arith.constant 0 : index
    %0 = vector.load %arg2[%c0, %c0_0, %c0_1] : memref<1x32x512xf32, #tpu.memory_space<vmem>>, vector<1x32x512xf32>
    %1 = vector.shape_cast %0 : vector<1x32x512xf32> to vector<32x512xf32>
    %c0_2 = arith.constant 0 : index
    %c0_3 = arith.constant 0 : index
    %c0_4 = arith.constant 0 : index
    %2 = vector.load %arg3[%c0_2, %c0_3, %c0_4] : memref<1x8x512xf32, #tpu.memory_space<vmem>>, vector<1x8x512xf32>
    %3 = vector.shape_cast %2 : vector<1x8x512xf32> to vector<8x512xf32>
    %cst = arith.constant dense<0xFF800000> : vector<512xf32>
    %4 = vector.multi_reduction <maximumf>, %3, %cst [0] : vector<8x512xf32> to vector<512xf32>
    %5 = vector.shape_cast %4 : vector<512xf32> to vector<1x512xf32>
    %6 = vector.broadcast %5 : vector<1x512xf32> to vector<8x512xf32>
    %7 = arith.subf %3, %6 : vector<8x512xf32>
    %8 = math.exp %7 : vector<8x512xf32>
    %cst_5 = arith.constant dense<0.000000e+00> : vector<512xf32>
    %9 = vector.multi_reduction <add>, %8, %cst_5 [0] : vector<8x512xf32> to vector<512xf32>
    %10 = vector.shape_cast %9 : vector<512xf32> to vector<1x512xf32>
    %11 = tpu.reciprocal %10 : vector<1x512xf32> -> vector<1x512xf32>
    %12 = math.log %10 : vector<1x512xf32>
    %13 = arith.mulf %8, %7 : vector<8x512xf32>
    %cst_6 = arith.constant dense<0.000000e+00> : vector<512xf32>
    %14 = vector.multi_reduction <add>, %13, %cst_6 [0] : vector<8x512xf32> to vector<512xf32>
    %15 = vector.shape_cast %14 : vector<512xf32> to vector<1x512xf32>
    %16 = arith.mulf %15, %11 : vector<1x512xf32>
    %17 = arith.subf %12, %16 : vector<1x512xf32>
    %c0_7 = arith.constant 0 : index
    %c0_8 = arith.constant 0 : index
    %18 = vector.load %arg4[%c0_7, %c0_8] : memref<80x32xf32, #tpu.memory_space<vmem>>, vector<80x32xf32>
    %cst_9 = arith.constant dense<0.000000e+00> : vector<80x512xf32>
    %19 = tpu.matmul %18, %1, %cst_9 {dimension_numbers = #tpu.dot_dimension_numbers<[1], [0], [0], [1], [0, 0, 1, 1], [], []>} : vector<80x32xf32>, vector<32x512xf32>, vector<80x512xf32> -> vector<80x512xf32>
    %c0_10 = arith.constant 0 : index
    %c0_11 = arith.constant 0 : index
    %20 = vector.load %arg5[%c0_10, %c0_11] : memref<80x1xf32, #tpu.memory_space<vmem>>, vector<80x1xf32>
    %21 = vector.broadcast %20 : vector<80x1xf32> to vector<80x512xf32>
    %22 = arith.addf %19, %21 : vector<80x512xf32>
    %c0_12 = arith.constant 0 : index
    %c0_13 = arith.constant 0 : index
    %23 = vector.load %arg6[%c0_12, %c0_13] : memref<80x1xf32, #tpu.memory_space<vmem>>, vector<80x1xf32>
    %24 = vector.broadcast %23 : vector<80x1xf32> to vector<80x512xf32>
    %25 = arith.mulf %22, %24 : vector<80x512xf32>
    %c0_14 = arith.constant 0 : index
    %c0_15 = arith.constant 0 : index
    %26 = vector.load %arg7[%c0_14, %c0_15] : memref<80x1xf32, #tpu.memory_space<vmem>>, vector<80x1xf32>
    %27 = vector.broadcast %26 : vector<80x1xf32> to vector<80x512xf32>
    %28 = arith.addf %25, %27 : vector<80x512xf32>
    %cst_16 = arith.constant 0.000000e+00 : f32
    %29 = vector.broadcast %cst_16 : f32 to vector<80x512xf32>
    %30 = arith.maximumf %28, %29 : vector<80x512xf32>
    %31 = vector.extract_strided_slice %30 {offsets = [0, 0], sizes = [16, 512], strides = [1, 1]} : vector<80x512xf32> to vector<16x512xf32>
    %32 = vector.extract_strided_slice %30 {offsets = [16, 0], sizes = [64, 512], strides = [1, 1]} : vector<80x512xf32> to vector<64x512xf32>
    %c0_17 = arith.constant 0 : index
    %c0_18 = arith.constant 0 : index
    %33 = vector.load %arg8[%c0_17, %c0_18] : memref<16x1xf32, #tpu.memory_space<vmem>>, vector<16x1xf32>
    %34 = vector.broadcast %33 : vector<16x1xf32> to vector<16x512xf32>
    %35 = arith.mulf %31, %34 : vector<16x512xf32>
    %cst_19 = arith.constant dense<0.000000e+00> : vector<512xf32>
    %36 = vector.multi_reduction <add>, %35, %cst_19 [0] : vector<16x512xf32> to vector<512xf32>
    %37 = vector.shape_cast %36 : vector<512xf32> to vector<1x512xf32>
    %c0_20 = arith.constant 0 : index
    %c0_21 = arith.constant 0 : index
    %38 = vector.load %arg9[%c0_20, %c0_21] : memref<1x1xf32, #tpu.memory_space<vmem>>, vector<1x1xf32>
    %39 = vector.broadcast %38 : vector<1x1xf32> to vector<1x512xf32>
    %40 = arith.addf %37, %39 : vector<1x512xf32>
    %41 = arith.negf %40 : vector<1x512xf32>
    %42 = math.exp %41 : vector<1x512xf32>
    %cst_22 = arith.constant 1.000000e+00 : f32
    %43 = vector.broadcast %cst_22 : f32 to vector<1x512xf32>
    %44 = arith.addf %43, %42 : vector<1x512xf32>
    %45 = arith.divf %43, %44 : vector<1x512xf32>
    %c0_23 = arith.constant 0 : index
    %c0_24 = arith.constant 0 : index
    %46 = vector.load %arg10[%c0_23, %c0_24] : memref<32x64xf32, #tpu.memory_space<vmem>>, vector<32x64xf32>
    %cst_25 = arith.constant dense<0.000000e+00> : vector<32x512xf32>
    %47 = tpu.matmul %46, %32, %cst_25 {dimension_numbers = #tpu.dot_dimension_numbers<[1], [0], [0], [1], [0, 0, 1, 1], [], []>} : vector<32x64xf32>, vector<64x512xf32>, vector<32x512xf32> -> vector<32x512xf32>
    %c0_26 = arith.constant 0 : index
    %c0_27 = arith.constant 0 : index
    %48 = vector.load %arg11[%c0_26, %c0_27] : memref<32x1xf32, #tpu.memory_space<vmem>>, vector<32x1xf32>
    %49 = vector.broadcast %48 : vector<32x1xf32> to vector<32x512xf32>
    %50 = arith.addf %47, %49 : vector<32x512xf32>
    %cst_28 = arith.constant 3.000000e-01 : f32
    %51 = vector.broadcast %cst_28 : f32 to vector<1x512xf32>
    %52 = arith.mulf %51, %17 : vector<1x512xf32>
    %53 = arith.addf %45, %52 : vector<1x512xf32>
    %cst_29 = arith.constant 5.000000e-01 : f32
    %54 = vector.broadcast %cst_29 : f32 to vector<1x512xf32>
    %55 = arith.cmpf ogt, %53, %54 : vector<1x512xf32>
    %cst_30 = arith.constant 5.000000e-01 : f32
    %56 = vector.broadcast %cst_30 : f32 to vector<32x512xf32>
    %57 = arith.mulf %56, %50 : vector<32x512xf32>
    %58 = arith.addf %1, %57 : vector<32x512xf32>
    %59 = vector.shape_cast %55 : vector<1x512xi1> to vector<1x512xi1>
    %60 = vector.broadcast %59 : vector<1x512xi1> to vector<32x512xi1>
    %61 = arith.select %60, %58, %1 : vector<32x512xi1>, vector<32x512xf32>
    %c0_31 = arith.constant 0 : index
    %c0_32 = arith.constant 0 : index
    %c0_33 = arith.constant 0 : index
    %62 = vector.load %arg12[%c0_31, %c0_32, %c0_33] : memref<1x32x512xf32, #tpu.memory_space<vmem>>, vector<1x32x512xf32>
    %63 = vector.shape_cast %62 : vector<1x32x512xf32> to vector<32x512xf32>
    %64 = vector.shape_cast %61 : vector<32x512xf32> to vector<1x32x512xf32>
    tpu.vector_store %arg12[%c0_31, %c0_32, %c0_33], %64 {strides = array<i32>} : memref<1x32x512xf32, #tpu.memory_space<vmem>>, vector<1x32x512xf32>,
    return
  }
  func.func @transform_0(%arg0: i32, %arg1: i32) -> (i32, i32, i32) {
    %c0_i32 = arith.constant 0 : i32
    %c0_i32_0 = arith.constant 0 : i32
    return %arg0, %c0_i32, %arg1 : i32, i32, i32
  }
  func.func @transform_1(%arg0: i32, %arg1: i32) -> (i32, i32, i32) {
    %c0_i32 = arith.constant 0 : i32
    %c0_i32_0 = arith.constant 0 : i32
    return %arg0, %c0_i32, %arg1 : i32, i32, i32
  }
  func.func @transform_2(%arg0: i32, %arg1: i32) -> (i32, i32) {
    %c0_i32 = arith.constant 0 : i32
    %c0_i32_0 = arith.constant 0 : i32
    %c0_i32_1 = arith.constant 0 : i32
    return %c0_i32, %c0_i32_0 : i32, i32
  }
  func.func @transform_3(%arg0: i32, %arg1: i32) -> (i32, i32) {
    %c0_i32 = arith.constant 0 : i32
    %c0_i32_0 = arith.constant 0 : i32
    %c0_i32_1 = arith.constant 0 : i32
    return %c0_i32, %c0_i32_0 : i32, i32
  }
  func.func @transform_4(%arg0: i32, %arg1: i32) -> (i32, i32) {
    %c0_i32 = arith.constant 0 : i32
    %c0_i32_0 = arith.constant 0 : i32
    %c0_i32_1 = arith.constant 0 : i32
    return %c0_i32, %c0_i32_0 : i32, i32
  }
  func.func @transform_5(%arg0: i32, %arg1: i32) -> (i32, i32) {
    %c0_i32 = arith.constant 0 : i32
    %c0_i32_0 = arith.constant 0 : i32
    %c0_i32_1 = arith.constant 0 : i32
    return %c0_i32, %c0_i32_0 : i32, i32
  }
  func.func @transform_6(%arg0: i32, %arg1: i32) -> (i32, i32) {
    %c0_i32 = arith.constant 0 : i32
    %c0_i32_0 = arith.constant 0 : i32
    %c0_i32_1 = arith.constant 0 : i32
    return %c0_i32, %c0_i32_0 : i32, i32
  }
  func.func @transform_7(%arg0: i32, %arg1: i32) -> (i32, i32) {
    %c0_i32 = arith.constant 0 : i32
    %c0_i32_0 = arith.constant 0 : i32
    %c0_i32_1 = arith.constant 0 : i32
    return %c0_i32, %c0_i32_0 : i32, i32
  }
  func.func @transform_8(%arg0: i32, %arg1: i32) -> (i32, i32) {
    %c0_i32 = arith.constant 0 : i32
    %c0_i32_0 = arith.constant 0 : i32
    %c0_i32_1 = arith.constant 0 : i32
    return %c0_i32, %c0_i32_0 : i32, i32
  }
  func.func @transform_9(%arg0: i32, %arg1: i32) -> (i32, i32) {
    %c0_i32 = arith.constant 0 : i32
    %c0_i32_0 = arith.constant 0 : i32
    %c0_i32_1 = arith.constant 0 : i32
    return %c0_i32, %c0_i32_0 : i32, i32
  }
  func.func @transform_10(%arg0: i32, %arg1: i32) -> (i32, i32, i32) {
    %c0_i32 = arith.constant 0 : i32
    %c0_i32_0 = arith.constant 0 : i32
    return %arg0, %c0_i32, %arg1 : i32, i32, i32
  }
}

</mosaic_0001>

<llo_original>
// kernel: boundary_aware_refinement.1
$region0: #{boundary_aware_refinement.1}
  #allocation0 [shape = 'u32[]', space=smem, size = 0x4, offset = 0x4, fixed_abs, tag = 'smem constant byte address 0x4 - core index']
  #allocation1 [shape = 'u32[144,128]{1,0:T(1,128)}', space=vmem, size = 0x12000, scoped, tag = 'internal scratch']
  #allocation2 [shape = 'f32[1,1]{1,0:T(1,128)S(1)}', space=vmem, size = 0x200, scoped, tag = 'scoped memory for boundary_aware_refinement.1']
  %s0 = inlined_call_operand.vmem [shape: f32[2,32,1024], index: 0, kind: input, shape index: {}, may-alias: {0,10}]
  %s1 = inlined_call_operand.vmem [shape: f32[2,8,1024], index: 1, kind: input, shape index: {}]
  %s2 = inlined_call_operand.vmem [shape: f32[80,32], index: 2, kind: input, shape index: {}]
  %s3 = inlined_call_operand.vmem [shape: f32[80,1], index: 3, kind: input, shape index: {}]
  %s4 = inlined_call_operand.vmem [shape: f32[80,1], index: 4, kind: input, shape index: {}]
  %s5 = inlined_call_operand.vmem [shape: f32[80,1], index: 5, kind: input, shape index: {}]
  %s6 = inlined_call_operand.vmem [shape: f32[16,1], index: 6, kind: input, shape index: {}]
  %s7 = inlined_call_operand.<no memory space> [shape: f32[1,1], index: 7, kind: input, shape index: {}]
  %s8 = inlined_call_operand.vmem [shape: f32[32,64], index: 8, kind: input, shape index: {}]
  %s9 = inlined_call_operand.vmem [shape: f32[32,1], index: 9, kind: input, shape index: {}]
  %s10 = inlined_call_operand.vmem [shape: f32[2,32,1024], index: 10, kind: output, shape index: {}, may-alias: {0,10}]
  %s11 = sld [smem:[#allocation0]]
  $region115: #{boundary_aware_refinement.1} parent=0
    _
  %s13 = ssub.s32 1, %s11
  %s14 = scalar_select 0, %s13, %s11
  %v15 = vstv %s7
  %16 = vst [vmem:[#allocation2] sm:$0x1] %v15
  $region1: #{boundary_aware_refinement.1} parent=0
    #allocation3 [shape = 'u8[131072]{0}', space=vmem, size = 0x20000, scoped, tag = 'input window, operand 0']
    #allocation4 [shape = 'u8[131072]{0}', space=vmem, size = 0x20000, scoped, tag = 'output window, operand 0']
    loop: start=0, step=1, limit=6
    $region2: #{boundary_aware_refinement.1} parent=1 // loop_pre_header
      _
    $region3: #{boundary_aware_refinement.1} parent=1 // loop_header
      %s18 = sphi 0, %s22
      %p19 = scmp.ge.s32.totalorder %s18, 6
      %s25 = sphi 0, %s37
      %s26 = sphi 0, %s33
      %s27 = sphi 0, %s25
      %s28 = sphi 0, %s26
      %s29 = sphi 0, %s27
      %s30 = sphi 0, %s28
      %s42 = sphi 0, %s44
      %s45 = sphi 0, %s42
      %s46 = sphi 0, %s45
      %s62 = sphi 0, %s46
      %s70 = sphi 0, %s72
      %s73 = sphi 0, %s70
      %s74 = sphi 0, %s73
      %s90 = sphi 0, %s74
      %s94 = sphi 0, %s94
      %s96 = sphi 0, %s94
      %s97 = sphi 0, %s96
      %s111 = sphi 0, %s97
      %s115 = sphi 0, %s115
      %s117 = sphi 0, %s115
      %s118 = sphi 0, %s117
      %s132 = sphi 0, %s118
      %s136 = sphi 0, %s136
      %s138 = sphi 0, %s136
      %s139 = sphi 0, %s138
      %s153 = sphi 0, %s139
      %s157 = sphi 0, %s157
      %s159 = sphi 0, %s157
      %s160 = sphi 0, %s159
      %s174 = sphi 0, %s160
      %s178 = sphi 0, %s178
      %s180 = sphi 0, %s178
      %s181 = sphi 0, %s180
      %s195 = sphi 0, %s181
      %s199 = sphi 0, %s199
      %s201 = sphi 0, %s199
      %s202 = sphi 0, %s201
      %s216 = sphi 0, %s202
      %s220 = sphi 0, %s220
      %s222 = sphi 0, %s220
      %s223 = sphi 0, %s222
      %s237 = sphi 0, %s223
      %s241 = sphi 0, %s241
      %s243 = sphi 0, %s241
      %s244 = sphi 0, %s243
      %s258 = sphi 0, %s244
      %s266 = sphi 0, %s268
      %s269 = sphi 0, %s266
      %s270 = sphi 0, %s269
      %s286 = sphi 0, %s270
    $region4: #{boundary_aware_refinement.1} parent=1 // loop_header_branch
      %21 = sbr.rel (%p19) target = $region8
    $region5: #{boundary_aware_refinement.1} parent=1 // loop_body
      %s23 = ssub.s32 %s18, 1
      %s24 = ssub.s32 %s18, 2
      %s31 = sadd.s32 1, %s26
      %p32 = scmp.ge.s32.totalorder %s31, 2
      %s33 = scalar_select %p32, 0, %s31
      %s34 = sadd.s32 1, %s25
      %s35 = scalar_select %p32, %s34, %s25
      %p36 = scmp.ge.s32.totalorder %s35, 2
      %s37 = scalar_select %p36, 0, %s35
      %s38 = ssub.s32 %s25, %s37
      %s39 = ssub.s32 %s26, %s33
      %s40 = sor.u32 %s38, %s39
      %p41 = scmp.eq.s32.totalorder %s40, 0
      %s43 = sadd.s32 %s42, 1
      %s44 = scalar_select %p41, %s42, %s43
      %p47 = pneg %p41
      %p48 = scmp.eq.s32.totalorder %s18, 3
      %p49 = por %p47, %p48
      %p50 = scmp.ne.s32.totalorder %s42, %s45
      %p51 = scmp.eq.s32.totalorder %s18, 0
      %p52 = por %p50, %p51
      %p53 = scmp.ne.s32.totalorder %s42, %s45
      %p54 = scmp.eq.s32.totalorder %s23, 3
      %p55 = por %p53, %p54
      %p56 = scmp.ne.s32.totalorder %s45, %s46
      %p57 = scmp.eq.s32.totalorder %s23, 0
      %p58 = por %p56, %p57
      %p59 = scmp.ne.s32.totalorder %s45, %s46
      %p60 = scmp.eq.s32.totalorder %s24, 3
      %p61 = por %p59, %p60
      %p63 = scmp.ne.s32.totalorder %s46, %s62
      %p64 = scmp.eq.s32.totalorder %s24, 0
      %p65 = por %p63, %p64
      %s66 = ssub.s32 %s25, %s37
      %s67 = ssub.s32 %s26, %s33
      %s68 = sor.u32 %s66, %s67
      %p69 = scmp.eq.s32.totalorder %s68, 0
      %s71 = sadd.s32 %s70, 1
      %s72 = scalar_select %p69, %s70, %s71
      %p75 = pneg %p69
      %p76 = scmp.eq.s32.totalorder %s18, 3
      %p77 = por %p75, %p76
      %p78 = scmp.ne.s32.totalorder %s70, %s73
      %p79 = scmp.eq.s32.totalorder %s18, 0
      %p80 = por %p78, %p79
      %p81 = scmp.ne.s32.totalorder %s70, %s73
      %p82 = scmp.eq.s32.totalorder %s23, 3
      %p83 = por %p81, %p82
      %p84 = scmp.ne.s32.totalorder %s73, %s74
      %p85 = scmp.eq.s32.totalorder %s23, 0
      %p86 = por %p84, %p85
      %p87 = scmp.ne.s32.totalorder %s73, %s74
      %p88 = scmp.eq.s32.totalorder %s24, 3
      %p89 = por %p87, %p88
      %p91 = scmp.ne.s32.totalorder %s74, %s90
      %p92 = scmp.eq.s32.totalorder %s24, 0
      %p93 = por %p91, %p92
      %s95 = sadd.s32 %s94, 1
      %p98 = scmp.eq.s32.totalorder %s18, 3
      %p99 = scmp.ne.s32.totalorder %s94, %s96
      %p100 = scmp.eq.s32.totalorder %s18, 0
      %p101 = por %p99, %p100
      %p102 = scmp.ne.s32.totalorder %s94, %s96
      %p103 = scmp.eq.s32.totalorder %s23, 3
      %p104 = por %p102, %p103
      %p105 = scmp.ne.s32.totalorder %s96, %s97
      %p106 = scmp.eq.s32.totalorder %s23, 0
      %p107 = por %p105, %p106
      %p108 = scmp.ne.s32.totalorder %s96, %s97
      %p109 = scmp.eq.s32.totalorder %s24, 3
      %p110 = por %p108, %p109
      %p112 = scmp.ne.s32.totalorder %s97, %s111
      %p113 = scmp.eq.s32.totalorder %s24, 0
      %p114 = por %p112, %p113
      %s116 = sadd.s32 %s115, 1
      %p119 = scmp.eq.s32.totalorder %s18, 3
      %p120 = scmp.ne.s32.totalorder %s115, %s117
      %p121 = scmp.eq.s32.totalorder %s18, 0
      %p122 = por %p120, %p121
      %p123 = scmp.ne.s32.totalorder %s115, %s117
      %p124 = scmp.eq.s32.totalorder %s23, 3
      %p125 = por %p123, %p124
      %p126 = scmp.ne.s32.totalorder %s117, %s118
      %p127 = scmp.eq.s32.totalorder %s23, 0
      %p128 = por %p126, %p127
      %p129 = scmp.ne.s32.totalorder %s117, %s118
      %p130 = scmp.eq.s32.totalorder %s24, 3
      %p131 = por %p129, %p130
      %p133 = scmp.ne.s32.totalorder %s118, %s132
      %p134 = scmp.eq.s32.totalorder %s24, 0
      %p135 = por %p133, %p134
      %s137 = sadd.s32 %s136, 1
      %p140 = scmp.eq.s32.totalorder %s18, 3
      %p141 = scmp.ne.s32.totalorder %s136, %s138
      %p142 = scmp.eq.s32.totalorder %s18, 0
      %p143 = por %p141, %p142
      %p144 = scmp.ne.s32.totalorder %s136, %s138
      %p145 = scmp.eq.s32.totalorder %s23, 3
      %p146 = por %p144, %p145
      %p147 = scmp.ne.s32.totalorder %s138, %s139
      %p148 = scmp.eq.s32.totalorder %s23, 0
      %p149 = por %p147, %p148
      %p150 = scmp.ne.s32.totalorder %s138, %s139
      %p151 = scmp.eq.s32.totalorder %s24, 3
      %p152 = por %p150, %p151
      %p154 = scmp.ne.s32.totalorder %s139, %s153
      %p155 = scmp.eq.s32.totalorder %s24, 0
      %p156 = por %p154, %p155
      %s158 = sadd.s32 %s157, 1
      %p161 = scmp.eq.s32.totalorder %s18, 3
      %p162 = scmp.ne.s32.totalorder %s157, %s159
      %p163 = scmp.eq.s32.totalorder %s18, 0
      %p164 = por %p162, %p163
      %p165 = scmp.ne.s32.totalorder %s157, %s159
      %p166 = scmp.eq.s32.totalorder %s23, 3
      %p167 = por %p165, %p166
      %p168 = scmp.ne.s32.totalorder %s159, %s160
      %p169 = scmp.eq.s32.totalorder %s23, 0
      %p170 = por %p168, %p169
      %p171 = scmp.ne.s32.totalorder %s159, %s160
      %p172 = scmp.eq.s32.totalorder %s24, 3
      %p173 = por %p171, %p172
      %p175 = scmp.ne.s32.totalorder %s160, %s174
      %p176 = scmp.eq.s32.totalorder %s24, 0
      %p177 = por %p175, %p176
      %s179 = sadd.s32 %s178, 1
      %p182 = scmp.eq.s32.totalorder %s18, 3
      %p183 = scmp.ne.s32.totalorder %s178, %s180
      %p184 = scmp.eq.s32.totalorder %s18, 0
      %p185 = por %p183, %p184
      %p186 = scmp.ne.s32.totalorder %s178, %s180
      %p187 = scmp.eq.s32.totalorder %s23, 3
      %p188 = por %p186, %p187
      %p189 = scmp.ne.s32.totalorder %s180, %s181
      %p190 = scmp.eq.s32.totalorder %s23, 0
      %p191 = por %p189, %p190
      %p192 = scmp.ne.s32.totalorder %s180, %s181
      %p193 = scmp.eq.s32.totalorder %s24, 3
      %p194 = por %p192, %p193
      %p196 = scmp.ne.s32.totalorder %s181, %s195
      %p197 = scmp.eq.s32.totalorder %s24, 0
      %p198 = por %p196, %p197
      %s200 = sadd.s32 %s199, 1
      %p203 = scmp.eq.s32.totalorder %s18, 3
      %p204 = scmp.ne.s32.totalorder %s199, %s201
      %p205 = scmp.eq.s32.totalorder %s18, 0
      %p206 = por %p204, %p205
      %p207 = scmp.ne.s32.totalorder %s199, %s201
      %p208 = scmp.eq.s32.totalorder %s23, 3
      %p209 = por %p207, %p208
      %p210 = scmp.ne.s32.totalorder %s201, %s202
      %p211 = scmp.eq.s32.totalorder %s23, 0
      %p212 = por %p210, %p211
      %p213 = scmp.ne.s32.totalorder %s201, %s202
      %p214 = scmp.eq.s32.totalorder %s24, 3
      %p215 = por %p213, %p214
      %p217 = scmp.ne.s32.totalorder %s202, %s216
      %p218 = scmp.eq.s32.totalorder %s24, 0
      %p219 = por %p217, %p218
      %s221 = sadd.s32 %s220, 1
      %p224 = scmp.eq.s32.totalorder %s18, 3
      %p225 = scmp.ne.s32.totalorder %s220, %s222
      %p226 = scmp.eq.s32.totalorder %s18, 0
      %p227 = por %p225, %p226
      %p228 = scmp.ne.s32.totalorder %s220, %s222
      %p229 = scmp.eq.s32.totalorder %s23, 3
      %p230 = por %p228, %p229
      %p231 = scmp.ne.s32.totalorder %s222, %s223
      %p232 = scmp.eq.s32.totalorder %s23, 0
      %p233 = por %p231, %p232
      %p234 = scmp.ne.s32.totalorder %s222, %s223
      %p235 = scmp.eq.s32.totalorder %s24, 3
      %p236 = por %p234, %p235
      %p238 = scmp.ne.s32.totalorder %s223, %s237
      %p239 = scmp.eq.s32.totalorder %s24, 0
      %p240 = por %p238, %p239
      %s242 = sadd.s32 %s241, 1
      %p245 = scmp.eq.s32.totalorder %s18, 3
      %p246 = scmp.ne.s32.totalorder %s241, %s243
      %p247 = scmp.eq.s32.totalorder %s18, 0
      %p248 = por %p246, %p247
      %p249 = scmp.ne.s32.totalorder %s241, %s243
      %p250 = scmp.eq.s32.totalorder %s23, 3
      %p251 = por %p249, %p250
      %p252 = scmp.ne.s32.totalorder %s243, %s244
      %p253 = scmp.eq.s32.totalorder %s23, 0
      %p254 = por %p252, %p253
      %p255 = scmp.ne.s32.totalorder %s243, %s244
      %p256 = scmp.eq.s32.totalorder %s24, 3
      %p257 = por %p255, %p256
      %p259 = scmp.ne.s32.totalorder %s244, %s258
      %p260 = scmp.eq.s32.totalorder %s24, 0
      %p261 = por %p259, %p260
      %s262 = ssub.s32 %s25, %s37
      %s263 = ssub.s32 %s26, %s33
      %s264 = sor.u32 %s262, %s263
      %p265 = scmp.eq.s32.totalorder %s264, 0
      %s267 = sadd.s32 %s266, 1
      %s268 = scalar_select %p265, %s266, %s267
      %p271 = pneg %p265
      %p272 = scmp.eq.s32.totalorder %s18, 3
      %p273 = por %p271, %p272
      %p274 = scmp.ne.s32.totalorder %s266, %s269
      %p275 = scmp.eq.s32.totalorder %s18, 0
      %p276 = por %p274, %p275
      %p277 = scmp.ne.s32.totalorder %s266, %s269
      %p278 = scmp.eq.s32.totalorder %s23, 3
      %p279 = por %p277, %p278
      %p280 = scmp.ne.s32.totalorder %s269, %s270
      %p281 = scmp.eq.s32.totalorder %s23, 0
      %p282 = por %p280, %p281
      %p283 = scmp.ne.s32.totalorder %s269, %s270
      %p284 = scmp.eq.s32.totalorder %s24, 3
      %p285 = por %p283, %p284
      %p287 = scmp.ne.s32.totalorder %s270, %s286
      %p288 = scmp.eq.s32.totalorder %s24, 0
      %p289 = por %p287, %p288
      %p290 = scmp.le.s32.totalorder 1, %s18
      %p291 = scmp.lt.s32.totalorder %s18, 5
      %p292 = pnand %p290, %p291
      %p293 = pneg %p292
      // Predicated region
      $region9: #{boundary_aware_refinement.1} parent=5 // pred_check
        _
      $region10: #{boundary_aware_refinement.1} parent=5 // pred_check_branch
        %295 = sbr.rel (%p292) target = $region12
      $region11: #{boundary_aware_refinement.1} parent=5 // pred_region
        %s296 = ssub.s32 %s18, 1
        // Predicated region
        $region13: #{boundary_aware_refinement.1} parent=11 // pred_check
          %p297 = pneg %p107
        $region14: #{boundary_aware_refinement.1} parent=11 // pred_check_branch
          %299 = sbr.rel (%p297) target = $region16
        $region15: #{boundary_aware_refinement.1} parent=11 // pred_region
          _
        $region16: #{boundary_aware_refinement.1} parent=11 // pred_fallthru
          _
        // Predicated region
        $region17: #{boundary_aware_refinement.1} parent=11 // pred_check
          %p300 = pneg %p128
        $region18: #{boundary_aware_refinement.1} parent=11 // pred_check_branch
          %302 = sbr.rel (%p300) target = $region20
        $region19: #{boundary_aware_refinement.1} parent=11 // pred_region
          _
        $region20: #{boundary_aware_refinement.1} parent=11 // pred_fallthru
          _
        // Predicated region
        $region21: #{boundary_aware_refinement.1} parent=11 // pred_check
          %p303 = pneg %p149
        $region22: #{boundary_aware_refinement.1} parent=11 // pred_check_branch
          %305 = sbr.rel (%p303) target = $region24
        $region23: #{boundary_aware_refinement.1} parent=11 // pred_region
          _
        $region24: #{boundary_aware_refinement.1} parent=11 // pred_fallthru
          _
        // Predicated region
        $region25: #{boundary_aware_refinement.1} parent=11 // pred_check
          %p306 = pneg %p170
        $region26: #{boundary_aware_refinement.1} parent=11 // pred_check_branch
          %308 = sbr.rel (%p306) target = $region28
        $region27: #{boundary_aware_refinement.1} parent=11 // pred_region
          _
        $region28: #{boundary_aware_refinement.1} parent=11 // pred_fallthru
          _
        // Predicated region
        $region29: #{boundary_aware_refinement.1} parent=11 // pred_check
          %p309 = pneg %p191
        $region30: #{boundary_aware_refinement.1} parent=11 // pred_check_branch
          %311 = sbr.rel (%p309) target = $region32
        $region31: #{boundary_aware_refinement.1} parent=11 // pred_region
          _
        $region32: #{boundary_aware_refinement.1} parent=11 // pred_fallthru
          _
        // Predicated region
        $region33: #{boundary_aware_refinement.1} parent=11 // pred_check
          %p312 = pneg %p212
        $region34: #{boundary_aware_refinement.1} parent=11 // pred_check_branch
          %314 = sbr.rel (%p312) target = $region36
        $region35: #{boundary_aware_refinement.1} parent=11 // pred_region
          _
        $region36: #{boundary_aware_refinement.1} parent=11 // pred_fallthru
          _
        // Predicated region
        $region37: #{boundary_aware_refinement.1} parent=11 // pred_check
          %p315 = pneg %p233
        $region38: #{boundary_aware_refinement.1} parent=11 // pred_check_branch
          %317 = sbr.rel (%p315) target = $region40
        $region39: #{boundary_aware_refinement.1} parent=11 // pred_region
          _
        $region40: #{boundary_aware_refinement.1} parent=11 // pred_fallthru
          _
        // Predicated region
        $region41: #{boundary_aware_refinement.1} parent=11 // pred_check
          %p318 = pneg %p254
        $region42: #{boundary_aware_refinement.1} parent=11 // pred_check_branch
          %320 = sbr.rel (%p318) target = $region44
        $region43: #{boundary_aware_refinement.1} parent=11 // pred_region
          _
        $region44: #{boundary_aware_refinement.1} parent=11 // pred_fallthru
          _
      $region12: #{boundary_aware_refinement.1} parent=5 // pred_fallthru
        _
      %p321 = scmp.lt.s32.totalorder %s18, 4
      // Predicated region
      $region45: #{boundary_aware_refinement.1} parent=5 // pred_check
        %p322 = pneg %p321
      $region46: #{boundary_aware_refinement.1} parent=5 // pred_check_branch
        %324 = sbr.rel (%p322) target = $region48
      $region47: #{boundary_aware_refinement.1} parent=5 // pred_region
        // Predicated region
        $region49: #{boundary_aware_refinement.1} parent=47 // pred_check
          %p325 = pneg %p52
        $region50: #{boundary_aware_refinement.1} parent=47 // pred_check_branch
          %327 = sbr.rel (%p325) target = $region52
        $region51: #{boundary_aware_refinement.1} parent=47 // pred_region
          %s328 = sand.u32 %s42, 1
          %s329 = sand.u32 %s42, 1
          %s330 = smul.addr %s329, 128
          %s331 = scalar_lea.vmem [#allocation3], %s330
          %s332 = smul.u32 4, %s26
          %s333 = smul.addr %s25, 32
          %s334 = sadd.s32 %s332, %s333
          %s335 = smul.addr %s334, 8
          %s336 = scalar_lea.vmem %s0, %s335
          // Predicated region
          $region53: #{boundary_aware_refinement.1} parent=51 // pred_check
            _
          $region54: #{boundary_aware_refinement.1} parent=51 // pred_check_branch
            %338 = sbr.rel (0) target = $region56
          $region55: #{boundary_aware_refinement.1} parent=51 // pred_region
            // Predicated region
            $region57: #{boundary_aware_refinement.1} parent=55 // pred_check
              _
            $region58: #{boundary_aware_refinement.1} parent=55 // pred_check_branch
              %340 = sbr.rel (0) target = $region60
            $region59: #{boundary_aware_refinement.1} parent=55 // pred_region
              loop: start=0, step=1, limit=1
              $region61: #{boundary_aware_refinement.1} parent=59 // loop_pre_header
                _
              $region62: #{boundary_aware_refinement.1} parent=59 // loop_header
                %s342 = sphi 0, %s346
                %p343 = scmp.ge.s32.totalorder %s342, 1
                %s347 = sphi %s336, %s336
                %s348 = sphi %s331, %s331
              $region63: #{boundary_aware_refinement.1} parent=59 // loop_header_branch
                %345 = sbr.rel (%p343) target = $region67
              $region64: #{boundary_aware_refinement.1} parent=59 // loop_body
                %v349 = vld [vmem:[%s347] sm:$0xff]
                %350 = vst [vmem:[%s348] sm:$0xff] %v349
                %v351 = vld [vmem:[%s347 + $0x8] sm:$0xff]
                %352 = vst [vmem:[%s348 + $0x8] sm:$0xff] %v351
                %v353 = vld [vmem:[%s347 + $0x10] sm:$0xff]
                %354 = vst [vmem:[%s348 + $0x10] sm:$0xff] %v353
                %v355 = vld [vmem:[%s347 + $0x18] sm:$0xff]
                %356 = vst [vmem:[%s348 + $0x18] sm:$0xff] %v355
                %v357 = vld [vmem:[%s347 + $0x40] sm:$0xff]
                %358 = vst [vmem:[%s348 + $0x20] sm:$0xff] %v357
                %v359 = vld [vmem:[%s347 + $0x48] sm:$0xff]
                %360 = vst [vmem:[%s348 + $0x28] sm:$0xff] %v359
                %v361 = vld [vmem:[%s347 + $0x50] sm:$0xff]
                %362 = vst [vmem:[%s348 + $0x30] sm:$0xff] %v361
                %v363 = vld [vmem:[%s347 + $0x58] sm:$0xff]
                %364 = vst [vmem:[%s348 + $0x38] sm:$0xff] %v363
                %v365 = vld [vmem:[%s347 + $0x80] sm:$0xff]
                %366 = vst [vmem:[%s348 + $0x40] sm:$0xff] %v365
                %v367 = vld [vmem:[%s347 + $0x88] sm:$0xff]
                %368 = vst [vmem:[%s348 + $0x48] sm:$0xff] %v367
                %v369 = vld [vmem:[%s347 + $0x90] sm:$0xff]
                %370 = vst [vmem:[%s348 + $0x50] sm:$0xff] %v369
                %v371 = vld [vmem:[%s347 + $0x98] sm:$0xff]
                %372 = vst [vmem:[%s348 + $0x58] sm:$0xff] %v371
                %v373 = vld [vmem:[%s347 + $0xc0] sm:$0xff]
                %374 = vst [vmem:[%s348 + $0x60] sm:$0xff] %v373
                %v375 = vld [vmem:[%s347 + $0xc8] sm:$0xff]
                %376 = vst [vmem:[%s348 + $0x68] sm:$0xff] %v375
                %v377 = vld [vmem:[%s347 + $0xd0] sm:$0xff]
                %378 = vst [vmem:[%s348 + $0x70] sm:$0xff] %v377
                %v379 = vld [vmem:[%s347 + $0xd8] sm:$0xff]
                %380 = vst [vmem:[%s348 + $0x78] sm:$0xff] %v379
              $region65: #{boundary_aware_refinement.1} parent=59 // loop_footer
                %s346 = sadd.s32 1, %s342
              $region66: #{boundary_aware_refinement.1} parent=59 // loop_footer_branch
                %341 = sbr.rel target = $region62
              $region67: #{boundary_aware_refinement.1} parent=59 // loop_exit
                _
            $region60: #{boundary_aware_refinement.1} parent=55 // pred_fallthru
              _
            // Predicated region
            $region68: #{boundary_aware_refinement.1} parent=55 // pred_check
              _
            $region69: #{boundary_aware_refinement.1} parent=55 // pred_check_branch
              %382 = sbr.rel target = $region71
            $region70: #{boundary_aware_refinement.1} parent=55 // pred_region
              _
            $region71: #{boundary_aware_refinement.1} parent=55 // pred_fallthru
              _
          $region56: #{boundary_aware_refinement.1} parent=51 // pred_fallthru
            _
          %383 = vnop
        $region52: #{boundary_aware_refinement.1} parent=47 // pred_fallthru
          _
        // Predicated region
        $region72: #{boundary_aware_refinement.1} parent=47 // pred_check
          %p384 = pneg %p80
        $region73: #{boundary_aware_refinement.1} parent=47 // pred_check_branch
          %386 = sbr.rel (%p384) target = $region75
        $region74: #{boundary_aware_refinement.1} parent=47 // pred_region
          %s387 = smul.u32 4, %s26
          %p388 = scmp.lt.s32.totalorder %s25, 1
          %s389 = scalar_select %p388, %s25, 1
          %p390 = scmp.lt.s32.totalorder %s387, 7
          %s391 = scalar_select %p390, %s387, 7
          %s392 = smul.addr %s389, 8
          %s393 = sadd.s32 %s391, %s392
          %s394 = smul.addr %s393, 8
          %s395 = scalar_lea.vmem %s1, %s394
          %s396 = smul.u32 4, %s26
        $region75: #{boundary_aware_refinement.1} parent=47 // pred_fallthru
          _
      $region48: #{boundary_aware_refinement.1} parent=5 // pred_fallthru
        _
      %p397 = scmp.le.s32.totalorder 1, %s18
      %p398 = scmp.lt.s32.totalorder %s18, 5
      %p399 = pnand %p397, %p398
      %p400 = pneg %p399
      // Predicated region
      $region76: #{boundary_aware_refinement.1} parent=5 // pred_check
        _
      $region77: #{boundary_aware_refinement.1} parent=5 // pred_check_branch
        %402 = sbr.rel (%p399) target = $region79
      $region78: #{boundary_aware_refinement.1} parent=5 // pred_region
        %s403 = ssub.s32 %s18, 1
        %s404 = sand.u32 %s45, 1
        %s405 = sand.u32 %s45, 1
        %s406 = smul.addr %s405, 128
        %s407 = scalar_lea.vmem [#allocation3], %s406
        // Predicated region
        $region80: #{boundary_aware_refinement.1} parent=78 // pred_check
          %p408 = pneg %p58
        $region81: #{boundary_aware_refinement.1} parent=78 // pred_check_branch
          %410 = sbr.rel (%p408) target = $region83
        $region82: #{boundary_aware_refinement.1} parent=78 // pred_region
          _
        $region83: #{boundary_aware_refinement.1} parent=78 // pred_fallthru
          _
        %s411 = sand.u32 %s45, 1
        %s412 = sand.u32 %s45, 1
        %s413 = smul.addr %s412, 128
        %s414 = scalar_lea.vmem [#allocation3], %s413
        %p415 = pneg %p58
        %p416 = pneg %p55
        %s417 = smul.u32 4, %s28
        %p418 = scmp.lt.s32.totalorder %s27, 1
        %s419 = scalar_select %p418, %s27, 1
        %p420 = scmp.lt.s32.totalorder %s417, 7
        %s421 = scalar_select %p420, %s417, 7
        %s422 = smul.addr %s419, 8
        %s423 = sadd.s32 %s421, %s422
        %s424 = smul.addr %s423, 8
        %s425 = scalar_lea.vmem %s1, %s424
        %p426 = pneg %p86
        %p427 = pneg %p83
        %p428 = pneg %p107
        %p429 = pneg %p104
        %p430 = pneg %p128
        %p431 = pneg %p125
        %p432 = pneg %p149
        %p433 = pneg %p146
        %p434 = pneg %p170
        %p435 = pneg %p167
        %p436 = pneg %p191
        %p437 = pneg %p188
        %p438 = pneg %p212
        %p439 = pneg %p209
        %p440 = pneg %p233
        %p441 = pneg %p230
        %p442 = pneg %p254
        %p443 = pneg %p251
        %p444 = pneg %p282
        %p445 = pneg %p279
        %s446 = sand.u32 %s269, 1
        %s447 = sand.u32 %s269, 1
        %s448 = smul.addr %s447, 128
        %s449 = scalar_lea.vmem [#allocation4], %s448
        %s450 = smul.u32 4, %s28
        %s451 = smul.u32 4, %s28
        %p452 = scmp.lt.s32.totalorder %s27, 1
        %s453 = scalar_select %p452, %s27, 1
        %p454 = scmp.lt.s32.totalorder %s451, 7
        %s455 = scalar_select %p454, %s451, 7
        %s456 = smul.addr %s453, 8
        %s457 = sadd.s32 %s455, %s456
        %s458 = smul.addr %s457, 8
        %s459 = scalar_lea.vmem %s1, %s458
        %s460 = smul.u32 4, %s28
        %s461 = smul.u32 4, %s28
        %v462 = vld [vmem:[%s407] sm:$0xff]
        %v463 = vld [vmem:[%s407 + $0x8] sm:$0xff]
        %v464 = vld [vmem:[%s407 + $0x10] sm:$0xff]
        %v465 = vld [vmem:[%s407 + $0x18] sm:$0xff]
        %v466 = vld [vmem:[%s407 + $0x20] sm:$0xff]
        %v467 = vld [vmem:[%s407 + $0x28] sm:$0xff]
        %v468 = vld [vmem:[%s407 + $0x30] sm:$0xff]
        %v469 = vld [vmem:[%s407 + $0x38] sm:$0xff]
        %v470 = vld [vmem:[%s407 + $0x40] sm:$0xff]
        %v471 = vld [vmem:[%s407 + $0x48] sm:$0xff]
        %v472 = vld [vmem:[%s407 + $0x50] sm:$0xff]
        %v473 = vld [vmem:[%s407 + $0x58] sm:$0xff]
        %v474 = vld [vmem:[%s407 + $0x60] sm:$0xff]
        %v475 = vld [vmem:[%s407 + $0x68] sm:$0xff]
        %v476 = vld [vmem:[%s407 + $0x70] sm:$0xff]
        %v477 = vld [vmem:[%s407 + $0x78] sm:$0xff]
        %v478 = vld [vmem:[%s459] sm:$0xff]
        %v479 = vld [vmem:[%s459 + $0x8] sm:$0xff]
        %v480 = vld [vmem:[%s459 + $0x10] sm:$0xff]
        %v481 = vld [vmem:[%s459 + $0x18] sm:$0xff]
        %v482 = vrot.slane %v478, 4
        %v483 = vmax.f32 %v478, %v482
        %v484 = vrot.slane %v483, 2
        %v485 = vmax.f32 %v483, %v484
        %v486 = vrot.slane %v485, 1
        %v487 = vmax.f32 %v485, %v486
        %v488 = vrot.slane %v479, 4
        %v489 = vmax.f32 %v479, %v488
        %v490 = vrot.slane %v489, 2
        %v491 = vmax.f32 %v489, %v490
        %v492 = vrot.slane %v491, 1
        %v493 = vmax.f32 %v491, %v492
        %v494 = vrot.slane %v480, 4
        %v495 = vmax.f32 %v480, %v494
        %v496 = vrot.slane %v495, 2
        %v497 = vmax.f32 %v495, %v496
        %v498 = vrot.slane %v497, 1
        %v499 = vmax.f32 %v497, %v498
        %v500 = vrot.slane %v481, 4
        %v501 = vmax.f32 %v481, %v500
        %v502 = vrot.slane %v501, 2
        %v503 = vmax.f32 %v501, %v502
        %v504 = vrot.slane %v503, 1
        %v505 = vmax.f32 %v503, %v504
        %v506 = vsub.f32 %v478, %v487
        %v507 = vsub.f32 %v479, %v493
        %v508 = vsub.f32 %v480, %v499
        %v509 = vsub.f32 %v481, %v505
        %v510 = vmul.f32 %v506, 1.442695
        %v511 = vpow.pop %v510
        %v512 = vmul.f32 %v507, 1.442695
        %v513 = vpow.pop %v512
        %v514 = vmul.f32 %v508, 1.442695
        %v515 = vpow.pop %v514
        %v516 = vmul.f32 %v509, 1.442695
        %v517 = vpow.pop %v516
        %v518 = vrot.slane %v511, 4
        %v519 = vadd.f32 %v511, %v518
        %v520 = vrot.slane %v519, 2
        %v521 = vadd.f32 %v519, %v520
        %v522 = vrot.slane %v521, 1
        %v523 = vadd.f32 %v521, %v522
        %v524 = vrot.slane %v513, 4
        %v525 = vadd.f32 %v513, %v524
        %v526 = vrot.slane %v525, 2
        %v527 = vadd.f32 %v525, %v526
        %v528 = vrot.slane %v527, 1
        %v529 = vadd.f32 %v527, %v528
        %v530 = vrot.slane %v515, 4
        %v531 = vadd.f32 %v515, %v530
        %v532 = vrot.slane %v531, 2
        %v533 = vadd.f32 %v531, %v532
        %v534 = vrot.slane %v533, 1
        %v535 = vadd.f32 %v533, %v534
        %v536 = vrot.slane %v517, 4
        %v537 = vadd.f32 %v517, %v536
        %v538 = vrot.slane %v537, 2
        %v539 = vadd.f32 %v537, %v538
        %v540 = vrot.slane %v539, 1
        %v541 = vadd.f32 %v539, %v540
        %v542 = vrcp.pop %v523
        %v543 = vrcp.pop %v529
        %v544 = vrcp.pop %v535
        %v545 = vrcp.pop %v541
        %v546 = vlog2.pop %v523
        %v547 = vmul.f32 %v546, 0.6931472
        %v548 = vlog2.pop %v529
        %v549 = vmul.f32 %v548, 0.6931472
        %v550 = vlog2.pop %v535
        %v551 = vmul.f32 %v550, 0.6931472
        %v552 = vlog2.pop %v541
        %v553 = vmul.f32 %v552, 0.6931472
        %v554 = vmul.f32 %v511, %v506
        %v555 = vmul.f32 %v513, %v507
        %v556 = vmul.f32 %v515, %v508
        %v557 = vmul.f32 %v517, %v509
        %v558 = vrot.slane %v554, 4
        %v559 = vadd.f32 %v554, %v558
        %v560 = vrot.slane %v559, 2
        %v561 = vadd.f32 %v559, %v560
        %v562 = vrot.slane %v561, 1
        %v563 = vadd.f32 %v561, %v562
        %v564 = vrot.slane %v555, 4
        %v565 = vadd.f32 %v555, %v564
        %v566 = vrot.slane %v565, 2
        %v567 = vadd.f32 %v565, %v566
        %v568 = vrot.slane %v567, 1
        %v569 = vadd.f32 %v567, %v568
        %v570 = vrot.slane %v556, 4
        %v571 = vadd.f32 %v556, %v570
        %v572 = vrot.slane %v571, 2
        %v573 = vadd.f32 %v571, %v572
        %v574 = vrot.slane %v573, 1
        %v575 = vadd.f32 %v573, %v574
        %v576 = vrot.slane %v557, 4
        %v577 = vadd.f32 %v557, %v576
        %v578 = vrot.slane %v577, 2
        %v579 = vadd.f32 %v577, %v578
        %v580 = vrot.slane %v579, 1
        %v581 = vadd.f32 %v579, %v580
        %v582 = vmul.f32 %v563, %v542
        %v583 = vmul.f32 %v569, %v543
        %v584 = vmul.f32 %v575, %v544
        %v585 = vmul.f32 %v581, %v545
        %v586 = vsub.f32 %v547, %v582
        %v587 = vsub.f32 %v549, %v583
        %v588 = vsub.f32 %v551, %v584
        %v589 = vsub.f32 %v553, %v585
        %v590 = vld [vmem:[%s2] sm:$0xff]
        %v591 = vld [vmem:[%s2 + $0x8] sm:$0xff]
        %v592 = vld [vmem:[%s2 + $0x10] sm:$0xff]
        %v593 = vld [vmem:[%s2 + $0x18] sm:$0xff]
        %v594 = vld [vmem:[%s2 + $0x20] sm:$0xff]
        %v595 = vld [vmem:[%s2 + $0x28] sm:$0xff]
        %v596 = vld [vmem:[%s2 + $0x30] sm:$0xff]
        %v597 = vld [vmem:[%s2 + $0x38] sm:$0xff]
        %v598 = vld [vmem:[%s2 + $0x40] sm:$0xff]
        %v599 = vld [vmem:[%s2 + $0x48] sm:$0xff]
        %v600 = vld [vmem:[%s3] sm:$0xff]
        %v601 = vld [vmem:[%s3 + $0x8] sm:$0xff]
        %v602 = vld [vmem:[%s3 + $0x10] sm:$0xff]
        %v603 = vld [vmem:[%s3 + $0x18] sm:$0xff]
        %v604 = vld [vmem:[%s3 + $0x20] sm:$0xff]
        %v605 = vld [vmem:[%s3 + $0x28] sm:$0xff]
        %v606 = vld [vmem:[%s3 + $0x30] sm:$0xff]
        %v607 = vld [vmem:[%s3 + $0x38] sm:$0xff]
        %v608 = vld [vmem:[%s3 + $0x40] sm:$0xff]
        %v609 = vld [vmem:[%s3 + $0x48] sm:$0xff]
        %611 = vset.pattern.permute.xlu0 0
        %612 = vperm.xlu0 %611, %v600
        %v613 = vpop.permute.xlu0 %612
        %616 = vset.pattern.permute.xlu0 0
        %617 = vperm.xlu0 %616, %v601
        %v618 = vpop.permute.xlu0 %617
        %621 = vset.pattern.permute.xlu0 0
        %622 = vperm.xlu0 %621, %v602
        %v623 = vpop.permute.xlu0 %622
        %626 = vset.pattern.permute.xlu0 0
        %627 = vperm.xlu0 %626, %v603
        %v628 = vpop.permute.xlu0 %627
        %631 = vset.pattern.permute.xlu0 0
        %632 = vperm.xlu0 %631, %v604
        %v633 = vpop.permute.xlu0 %632
        %636 = vset.pattern.permute.xlu0 0
        %637 = vperm.xlu0 %636, %v605
        %v638 = vpop.permute.xlu0 %637
        %641 = vset.pattern.permute.xlu0 0
        %642 = vperm.xlu0 %641, %v606
        %v643 = vpop.permute.xlu0 %642
        %646 = vset.pattern.permute.xlu0 0
        %647 = vperm.xlu0 %646, %v607
        %v648 = vpop.permute.xlu0 %647
        %651 = vset.pattern.permute.xlu0 0
        %652 = vperm.xlu0 %651, %v608
        %v653 = vpop.permute.xlu0 %652
        %656 = vset.pattern.permute.xlu0 0
        %657 = vperm.xlu0 %656, %v609
        %v658 = vpop.permute.xlu0 %657
        %vm660 = vcmask 261120
        %v662 = vsel %vm660, %v590, 0
        %v665 = vsel %vm660, %v591, 0
        %v668 = vsel %vm660, %v592, 0
        %v671 = vsel %vm660, %v593, 0
        %v674 = vsel %vm660, %v594, 0
        %v677 = vsel %vm660, %v595, 0
        %v680 = vsel %vm660, %v596, 0
        %v683 = vsel %vm660, %v597, 0
        %v686 = vsel %vm660, %v598, 0
        %v689 = vsel %vm660, %v599, 0
        %691 = vmatprep.subr.mxu0 0.0
        %692 = vmatpush1.msra.mxu0 0.0
        %693 = vmatprep.subr.mxu0 0.0
        %694 = vmatpush1.msra.mxu0 0.0
        %695 = vmatprep.subr.mxu0 0.0
        %696 = vmatpush1.msra.mxu0 0.0
        %697 = vmatprep.subr.mxu0 0.0
        %698 = vmatpush1.msra.mxu0 0.0
        %699 = vmatprep.subr.mxu0 0.0
        %700 = vmatpush1.msra.mxu0 0.0
        %701 = vmatprep.subr.mxu0 0.0
        %702 = vmatpush1.msra.mxu0 0.0
        %703 = vmatprep.subr.mxu0 0.0
        %704 = vmatpush1.msra.mxu0 0.0
        %705 = vmatprep.subr.mxu0 0.0
        %706 = vmatpush1.msra.mxu0 0.0
        %707 = vmatprep.subr.mxu0 0.0
        %708 = vmatpush1.msra.mxu0 0.0
        %709 = vmatprep.subr.mxu0 0.0
        %710 = vmatpush1.msra.mxu0 0.0
        %711 = vmatprep.subr.mxu0 0.0
        %712 = vmatpush1.msra.mxu0 0.0
        %713 = vmatprep.subr.mxu0 0.0
        %714 = vmatpush1.msra.mxu0 0.0
        %715 = vmatprep.subr.mxu0 %v475
        %716 = vmatpush1.msra.mxu0 %v474
        %717 = vmatprep.subr.mxu0 %v471
        %718 = vmatpush1.msra.mxu0 %v470
        %719 = vmatprep.subr.mxu0 %v467
        %720 = vmatpush1.msra.mxu0 %v466
        %721 = vmatprep.subr.mxu0 %v463
        %722 = vmatpush1.msra.mxu0 %v462
        %723 = vmatprep.subr.mxu0 0.0
        %724 = vmatpush2.msra.mxu0 0.0
        %725 = vmatprep.subr.mxu0 0.0
        %726 = vmatpush2.msra.mxu0 0.0
        %727 = vmatprep.subr.mxu0 0.0
        %728 = vmatpush2.msra.mxu0 0.0
        %729 = vmatprep.subr.mxu0 0.0
        %730 = vmatpush2.msra.mxu0 0.0
        %731 = vmatprep.subr.mxu0 0.0
        %732 = vmatpush2.msra.mxu0 0.0
        %733 = vmatprep.subr.mxu0 0.0
        %734 = vmatpush2.msra.mxu0 0.0
        %735 = vmatprep.subr.mxu0 0.0
        %736 = vmatpush2.msra.mxu0 0.0
        %737 = vmatprep.subr.mxu0 0.0
        %738 = vmatpush2.msra.mxu0 0.0
        %739 = vmatprep.subr.mxu0 0.0
        %740 = vmatpush2.msra.mxu0 0.0
        %741 = vmatprep.subr.mxu0 0.0
        %742 = vmatpush2.msra.mxu0 0.0
        %743 = vmatprep.subr.mxu0 0.0
        %744 = vmatpush2.msra.mxu0 0.0
        %745 = vmatprep.subr.mxu0 0.0
        %746 = vmatpush2.msra.mxu0 0.0
        %747 = vmatprep.subr.mxu0 0.0
        %748 = vmatpush2.msra.mxu0 0.0
        %749 = vmatprep.subr.mxu0 0.0
        %750 = vmatpush2.msra.mxu0 0.0
        %751 = vmatprep.subr.mxu0 0.0
        %752 = vmatpush2.msra.mxu0 0.0
        %753 = vmatprep.subr.mxu0 0.0
        %754 = vmatpush2.msra.mxu0 0.0
        %755 = vmatprep.mubr.f32.mxu0 0.0
        %756 = vmatmul.mubr.f32.gmra.mxu0 %v662
        %v757 = vpop.f32.mrf.mxu0
        %v758 = vadd.f32 %v613, %v757
        %v759 = vpop.f32.mrf.mxu0
        %v760 = vadd.f32 %v613, %v759
        %761 = vmatprep.mubr.f32.mxu0 0.0
        %762 = vmatmul.mubr.f32.gmra.mxu0 %v665
        %v763 = vpop.f32.mrf.mxu0
        %v764 = vadd.f32 %v618, %v763
        %v765 = vpop.f32.mrf.mxu0
        %v766 = vadd.f32 %v618, %v765
        %767 = vmatprep.mubr.f32.mxu0 0.0
        %768 = vmatmul.mubr.f32.gmra.mxu0 %v668
        %v769 = vpop.f32.mrf.mxu0
        %v770 = vadd.f32 %v623, %v769
        %v771 = vpop.f32.mrf.mxu0
        %v772 = vadd.f32 %v623, %v771
        %773 = vmatprep.mubr.f32.mxu0 0.0
        %774 = vmatmul.mubr.f32.gmra.mxu0 %v671
        %v775 = vpop.f32.mrf.mxu0
        %v776 = vadd.f32 %v628, %v775
        %v777 = vpop.f32.mrf.mxu0
        %v778 = vadd.f32 %v628, %v777
        %779 = vmatprep.mubr.f32.mxu0 0.0
        %780 = vmatmul.mubr.f32.gmra.mxu0 %v674
        %v781 = vpop.f32.mrf.mxu0
        %v782 = vadd.f32 %v633, %v781
        %v783 = vpop.f32.mrf.mxu0
        %v784 = vadd.f32 %v633, %v783
        %785 = vmatprep.mubr.f32.mxu0 0.0
        %786 = vmatmul.mubr.f32.gmra.mxu0 %v677
        %v787 = vpop.f32.mrf.mxu0
        %v788 = vadd.f32 %v638, %v787
        %v789 = vpop.f32.mrf.mxu0
        %v790 = vadd.f32 %v638, %v789
        %791 = vmatprep.mubr.f32.mxu0 0.0
        %792 = vmatmul.mubr.f32.gmra.mxu0 %v680
        %v793 = vpop.f32.mrf.mxu0
        %v794 = vadd.f32 %v643, %v793
        %v795 = vpop.f32.mrf.mxu0
        %v796 = vadd.f32 %v643, %v795
        %797 = vmatprep.mubr.f32.mxu0 0.0
        %798 = vmatmul.mubr.f32.gmra.mxu0 %v683
        %v799 = vpop.f32.mrf.mxu0
        %v800 = vadd.f32 %v648, %v799
        %v801 = vpop.f32.mrf.mxu0
        %v802 = vadd.f32 %v648, %v801
        %803 = vmatprep.mubr.f32.mxu0 0.0
        %804 = vmatmul.mubr.f32.gmra.mxu0 %v686
        %v805 = vpop.f32.mrf.mxu0
        %v806 = vadd.f32 %v653, %v805
        %v807 = vpop.f32.mrf.mxu0
        %v808 = vadd.f32 %v653, %v807
        %809 = vmatprep.mubr.f32.mxu0 0.0
        %810 = vmatmul.mubr.f32.gmra.mxu0 %v689
        %v811 = vpop.f32.mrf.mxu0
        %v812 = vadd.f32 %v658, %v811
        %v813 = vpop.f32.mrf.mxu0
        %v814 = vadd.f32 %v658, %v813
        %815 = vdwg.mxu0
        %816 = vmatprep.subr.mxu0 0.0
        %817 = vmatpush1.msra.mxu0 0.0
        %818 = vmatprep.subr.mxu0 0.0
        %819 = vmatpush1.msra.mxu0 0.0
        %820 = vmatprep.subr.mxu0 0.0
        %821 = vmatpush1.msra.mxu0 0.0
        %822 = vmatprep.subr.mxu0 0.0
        %823 = vmatpush1.msra.mxu0 0.0
        %824 = vmatprep.subr.mxu0 0.0
        %825 = vmatpush1.msra.mxu0 0.0
        %826 = vmatprep.subr.mxu0 0.0
        %827 = vmatpush1.msra.mxu0 0.0
        %828 = vmatprep.subr.mxu0 0.0
        %829 = vmatpush1.msra.mxu0 0.0
        %830 = vmatprep.subr.mxu0 0.0
        %831 = vmatpush1.msra.mxu0 0.0
        %832 = vmatprep.subr.mxu0 0.0
        %833 = vmatpush1.msra.mxu0 0.0
        %834 = vmatprep.subr.mxu0 0.0
        %835 = vmatpush1.msra.mxu0 0.0
        %836 = vmatprep.subr.mxu0 0.0
        %837 = vmatpush1.msra.mxu0 0.0
        %838 = vmatprep.subr.mxu0 0.0
        %839 = vmatpush1.msra.mxu0 0.0
        %840 = vmatprep.subr.mxu0 %v477
        %841 = vmatpush1.msra.mxu0 %v476
        %842 = vmatprep.subr.mxu0 %v473
        %843 = vmatpush1.msra.mxu0 %v472
        %844 = vmatprep.subr.mxu0 %v469
        %845 = vmatpush1.msra.mxu0 %v468
        %846 = vmatprep.subr.mxu0 %v465
        %847 = vmatpush1.msra.mxu0 %v464
        %848 = vmatprep.subr.mxu0 0.0
        %849 = vmatpush2.msra.mxu0 0.0
        %850 = vmatprep.subr.mxu0 0.0
        %851 = vmatpush2.msra.mxu0 0.0
        %852 = vmatprep.subr.mxu0 0.0
        %853 = vmatpush2.msra.mxu0 0.0
        %854 = vmatprep.subr.mxu0 0.0
        %855 = vmatpush2.msra.mxu0 0.0
        %856 = vmatprep.subr.mxu0 0.0
        %857 = vmatpush2.msra.mxu0 0.0
        %858 = vmatprep.subr.mxu0 0.0
        %859 = vmatpush2.msra.mxu0 0.0
        %860 = vmatprep.subr.mxu0 0.0
        %861 = vmatpush2.msra.mxu0 0.0
        %862 = vmatprep.subr.mxu0 0.0
        %863 = vmatpush2.msra.mxu0 0.0
        %864 = vmatprep.subr.mxu0 0.0
        %865 = vmatpush2.msra.mxu0 0.0
        %866 = vmatprep.subr.mxu0 0.0
        %867 = vmatpush2.msra.mxu0 0.0
        %868 = vmatprep.subr.mxu0 0.0
        %869 = vmatpush2.msra.mxu0 0.0
        %870 = vmatprep.subr.mxu0 0.0
        %871 = vmatpush2.msra.mxu0 0.0
        %872 = vmatprep.subr.mxu0 0.0
        %873 = vmatpush2.msra.mxu0 0.0
        %874 = vmatprep.subr.mxu0 0.0
        %875 = vmatpush2.msra.mxu0 0.0
        %876 = vmatprep.subr.mxu0 0.0
        %877 = vmatpush2.msra.mxu0 0.0
        %878 = vmatprep.subr.mxu0 0.0
        %879 = vmatpush2.msra.mxu0 0.0
        %880 = vmatprep.mubr.f32.mxu0 0.0
        %881 = vmatmul.mubr.f32.gmra.mxu0 %v662
        %v882 = vpop.f32.mrf.mxu0
        %v883 = vadd.f32 %v613, %v882
        %v884 = vpop.f32.mrf.mxu0
        %v885 = vadd.f32 %v613, %v884
        %886 = vmatprep.mubr.f32.mxu0 0.0
        %887 = vmatmul.mubr.f32.gmra.mxu0 %v665
        %v888 = vpop.f32.mrf.mxu0
        %v889 = vadd.f32 %v618, %v888
        %v890 = vpop.f32.mrf.mxu0
        %v891 = vadd.f32 %v618, %v890
        %892 = vmatprep.mubr.f32.mxu0 0.0
        %893 = vmatmul.mubr.f32.gmra.mxu0 %v668
        %v894 = vpop.f32.mrf.mxu0
        %v895 = vadd.f32 %v623, %v894
        %v896 = vpop.f32.mrf.mxu0
        %v897 = vadd.f32 %v623, %v896
        %898 = vmatprep.mubr.f32.mxu0 0.0
        %899 = vmatmul.mubr.f32.gmra.mxu0 %v671
        %v900 = vpop.f32.mrf.mxu0
        %v901 = vadd.f32 %v628, %v900
        %v902 = vpop.f32.mrf.mxu0
        %v903 = vadd.f32 %v628, %v902
        %904 = vmatprep.mubr.f32.mxu0 0.0
        %905 = vmatmul.mubr.f32.gmra.mxu0 %v674
        %v906 = vpop.f32.mrf.mxu0
        %v907 = vadd.f32 %v633, %v906
        %v908 = vpop.f32.mrf.mxu0
        %v909 = vadd.f32 %v633, %v908
        %910 = vmatprep.mubr.f32.mxu0 0.0
        %911 = vmatmul.mubr.f32.gmra.mxu0 %v677
        %v912 = vpop.f32.mrf.mxu0
        %v913 = vadd.f32 %v638, %v912
        %v914 = vpop.f32.mrf.mxu0
        %v915 = vadd.f32 %v638, %v914
        %916 = vmatprep.mubr.f32.mxu0 0.0
        %917 = vmatmul.mubr.f32.gmra.mxu0 %v680
        %v918 = vpop.f32.mrf.mxu0
        %v919 = vadd.f32 %v643, %v918
        %v920 = vpop.f32.mrf.mxu0
        %v921 = vadd.f32 %v643, %v920
        %922 = vmatprep.mubr.f32.mxu0 0.0
        %923 = vmatmul.mubr.f32.gmra.mxu0 %v683
        %v924 = vpop.f32.mrf.mxu0
        %v925 = vadd.f32 %v648, %v924
        %v926 = vpop.f32.mrf.mxu0
        %v927 = vadd.f32 %v648, %v926
        %928 = vmatprep.mubr.f32.mxu0 0.0
        %929 = vmatmul.mubr.f32.gmra.mxu0 %v686
        %v930 = vpop.f32.mrf.mxu0
        %v931 = vadd.f32 %v653, %v930
        %v932 = vpop.f32.mrf.mxu0
        %v933 = vadd.f32 %v653, %v932
        %934 = vmatprep.mubr.f32.mxu0 0.0
        %935 = vmatmul.mubr.f32.gmra.mxu0 %v689
        %v936 = vpop.f32.mrf.mxu0
        %v937 = vadd.f32 %v658, %v936
        %v938 = vpop.f32.mrf.mxu0
        %v939 = vadd.f32 %v658, %v938
        %940 = vdwg.mxu0
        %v941 = vld [vmem:[%s4] sm:$0xff]
        %v942 = vld [vmem:[%s4 + $0x8] sm:$0xff]
        %v943 = vld [vmem:[%s4 + $0x10] sm:$0xff]
        %v944 = vld [vmem:[%s4 + $0x18] sm:$0xff]
        %v945 = vld [vmem:[%s4 + $0x20] sm:$0xff]
        %v946 = vld [vmem:[%s4 + $0x28] sm:$0xff]
        %v947 = vld [vmem:[%s4 + $0x30] sm:$0xff]
        %v948 = vld [vmem:[%s4 + $0x38] sm:$0xff]
        %v949 = vld [vmem:[%s4 + $0x40] sm:$0xff]
        %v950 = vld [vmem:[%s4 + $0x48] sm:$0xff]
        %952 = vset.pattern.permute.xlu0 0
        %953 = vperm.xlu0 %952, %v941
        %v954 = vpop.permute.xlu0 %953
        %957 = vset.pattern.permute.xlu0 0
        %958 = vperm.xlu0 %957, %v942
        %v959 = vpop.permute.xlu0 %958
        %962 = vset.pattern.permute.xlu0 0
        %963 = vperm.xlu0 %962, %v943
        %v964 = vpop.permute.xlu0 %963
        %967 = vset.pattern.permute.xlu0 0
        %968 = vperm.xlu0 %967, %v944
        %v969 = vpop.permute.xlu0 %968
        %972 = vset.pattern.permute.xlu0 0
        %973 = vperm.xlu0 %972, %v945
        %v974 = vpop.permute.xlu0 %973
        %977 = vset.pattern.permute.xlu0 0
        %978 = vperm.xlu0 %977, %v946
        %v979 = vpop.permute.xlu0 %978
        %982 = vset.pattern.permute.xlu0 0
        %983 = vperm.xlu0 %982, %v947
        %v984 = vpop.permute.xlu0 %983
        %987 = vset.pattern.permute.xlu0 0
        %988 = vperm.xlu0 %987, %v948
        %v989 = vpop.permute.xlu0 %988
        %992 = vset.pattern.permute.xlu0 0
        %993 = vperm.xlu0 %992, %v949
        %v994 = vpop.permute.xlu0 %993
        %997 = vset.pattern.permute.xlu0 0
        %998 = vperm.xlu0 %997, %v950
        %v999 = vpop.permute.xlu0 %998
        %v1001 = vmul.f32 %v758, %v954
        %v1002 = vmul.f32 %v760, %v954
        %v1003 = vmul.f32 %v883, %v954
        %v1004 = vmul.f32 %v885, %v954
        %v1005 = vmul.f32 %v764, %v959
        %v1006 = vmul.f32 %v766, %v959
        %v1007 = vmul.f32 %v889, %v959
        %v1008 = vmul.f32 %v891, %v959
        %v1009 = vmul.f32 %v770, %v964
        %v1010 = vmul.f32 %v772, %v964
        %v1011 = vmul.f32 %v895, %v964
        %v1012 = vmul.f32 %v897, %v964
        %v1013 = vmul.f32 %v776, %v969
        %v1014 = vmul.f32 %v778, %v969
        %v1015 = vmul.f32 %v901, %v969
        %v1016 = vmul.f32 %v903, %v969
        %v1017 = vmul.f32 %v782, %v974
        %v1018 = vmul.f32 %v784, %v974
        %v1019 = vmul.f32 %v907, %v974
        %v1020 = vmul.f32 %v909, %v974
        %v1021 = vmul.f32 %v788, %v979
        %v1022 = vmul.f32 %v790, %v979
        %v1023 = vmul.f32 %v913, %v979
        %v1024 = vmul.f32 %v915, %v979
        %v1025 = vmul.f32 %v794, %v984
        %v1026 = vmul.f32 %v796, %v984
        %v1027 = vmul.f32 %v919, %v984
        %v1028 = vmul.f32 %v921, %v984
        %v1029 = vmul.f32 %v800, %v989
        %v1030 = vmul.f32 %v802, %v989
        %v1031 = vmul.f32 %v925, %v989
        %v1032 = vmul.f32 %v927, %v989
        %v1033 = vmul.f32 %v806, %v994
        %v1034 = vmul.f32 %v808, %v994
        %v1035 = vmul.f32 %v931, %v994
        %v1036 = vmul.f32 %v933, %v994
        %v1037 = vmul.f32 %v812, %v999
        %v1038 = vmul.f32 %v814, %v999
        %v1039 = vmul.f32 %v937, %v999
        %v1040 = vmul.f32 %v939, %v999
        %v1041 = vld [vmem:[%s5] sm:$0xff]
        %v1042 = vld [vmem:[%s5 + $0x8] sm:$0xff]
        %v1043 = vld [vmem:[%s5 + $0x10] sm:$0xff]
        %v1044 = vld [vmem:[%s5 + $0x18] sm:$0xff]
        %v1045 = vld [vmem:[%s5 + $0x20] sm:$0xff]
        %v1046 = vld [vmem:[%s5 + $0x28] sm:$0xff]
        %v1047 = vld [vmem:[%s5 + $0x30] sm:$0xff]
        %v1048 = vld [vmem:[%s5 + $0x38] sm:$0xff]
        %v1049 = vld [vmem:[%s5 + $0x40] sm:$0xff]
        %v1050 = vld [vmem:[%s5 + $0x48] sm:$0xff]
        %1052 = vset.pattern.permute.xlu0 0
        %1053 = vperm.xlu0 %1052, %v1041
        %v1054 = vpop.permute.xlu0 %1053
        %1057 = vset.pattern.permute.xlu0 0
        %1058 = vperm.xlu0 %1057, %v1042
        %v1059 = vpop.permute.xlu0 %1058
        %1062 = vset.pattern.permute.xlu0 0
        %1063 = vperm.xlu0 %1062, %v1043
        %v1064 = vpop.permute.xlu0 %1063
        %1067 = vset.pattern.permute.xlu0 0
        %1068 = vperm.xlu0 %1067, %v1044
        %v1069 = vpop.permute.xlu0 %1068
        %1072 = vset.pattern.permute.xlu0 0
        %1073 = vperm.xlu0 %1072, %v1045
        %v1074 = vpop.permute.xlu0 %1073
        %1077 = vset.pattern.permute.xlu0 0
        %1078 = vperm.xlu0 %1077, %v1046
        %v1079 = vpop.permute.xlu0 %1078
        %1082 = vset.pattern.permute.xlu0 0
        %1083 = vperm.xlu0 %1082, %v1047
        %v1084 = vpop.permute.xlu0 %1083
        %1087 = vset.pattern.permute.xlu0 0
        %1088 = vperm.xlu0 %1087, %v1048
        %v1089 = vpop.permute.xlu0 %1088
        %1092 = vset.pattern.permute.xlu0 0
        %1093 = vperm.xlu0 %1092, %v1049
        %v1094 = vpop.permute.xlu0 %1093
        %1097 = vset.pattern.permute.xlu0 0
        %1098 = vperm.xlu0 %1097, %v1050
        %v1099 = vpop.permute.xlu0 %1098
        %v1101 = vadd.f32 %v1001, %v1054
        %v1102 = vadd.f32 %v1002, %v1054
        %v1103 = vadd.f32 %v1003, %v1054
        %v1104 = vadd.f32 %v1004, %v1054
        %v1105 = vadd.f32 %v1005, %v1059
        %v1106 = vadd.f32 %v1006, %v1059
        %v1107 = vadd.f32 %v1007, %v1059
        %v1108 = vadd.f32 %v1008, %v1059
        %v1109 = vadd.f32 %v1009, %v1064
        %v1110 = vadd.f32 %v1010, %v1064
        %v1111 = vadd.f32 %v1011, %v1064
        %v1112 = vadd.f32 %v1012, %v1064
        %v1113 = vadd.f32 %v1013, %v1069
        %v1114 = vadd.f32 %v1014, %v1069
        %v1115 = vadd.f32 %v1015, %v1069
        %v1116 = vadd.f32 %v1016, %v1069
        %v1117 = vadd.f32 %v1017, %v1074
        %v1118 = vadd.f32 %v1018, %v1074
        %v1119 = vadd.f32 %v1019, %v1074
        %v1120 = vadd.f32 %v1020, %v1074
        %v1121 = vadd.f32 %v1021, %v1079
        %v1122 = vadd.f32 %v1022, %v1079
        %v1123 = vadd.f32 %v1023, %v1079
        %v1124 = vadd.f32 %v1024, %v1079
        %v1125 = vadd.f32 %v1025, %v1084
        %v1126 = vadd.f32 %v1026, %v1084
        %v1127 = vadd.f32 %v1027, %v1084
        %v1128 = vadd.f32 %v1028, %v1084
        %v1129 = vadd.f32 %v1029, %v1089
        %v1130 = vadd.f32 %v1030, %v1089
        %v1131 = vadd.f32 %v1031, %v1089
        %v1132 = vadd.f32 %v1032, %v1089
        %v1133 = vadd.f32 %v1033, %v1094
        %v1134 = vadd.f32 %v1034, %v1094
        %v1135 = vadd.f32 %v1035, %v1094
        %v1136 = vadd.f32 %v1036, %v1094
        %v1137 = vadd.f32 %v1037, %v1099
        %v1138 = vadd.f32 %v1038, %v1099
        %v1139 = vadd.f32 %v1039, %v1099
        %v1140 = vadd.f32 %v1040, %v1099
        %v1141 = vmax.f32 %v1101, 0.0
        %v1142 = vmax.f32 %v1102, 0.0
        %v1143 = vmax.f32 %v1103, 0.0
        %v1144 = vmax.f32 %v1104, 0.0
        %v1145 = vmax.f32 %v1105, 0.0
        %v1146 = vmax.f32 %v1106, 0.0
        %v1147 = vmax.f32 %v1107, 0.0
        %v1148 = vmax.f32 %v1108, 0.0
        %v1149 = vmax.f32 %v1109, 0.0
        %v1150 = vmax.f32 %v1110, 0.0
        %v1151 = vmax.f32 %v1111, 0.0
        %v1152 = vmax.f32 %v1112, 0.0
        %v1153 = vmax.f32 %v1113, 0.0
        %v1154 = vmax.f32 %v1114, 0.0
        %v1155 = vmax.f32 %v1115, 0.0
        %v1156 = vmax.f32 %v1116, 0.0
        %v1157 = vmax.f32 %v1117, 0.0
        %v1158 = vmax.f32 %v1118, 0.0
        %v1159 = vmax.f32 %v1119, 0.0
        %v1160 = vmax.f32 %v1120, 0.0
        %v1161 = vmax.f32 %v1121, 0.0
        %v1162 = vmax.f32 %v1122, 0.0
        %v1163 = vmax.f32 %v1123, 0.0
        %v1164 = vmax.f32 %v1124, 0.0
        %v1165 = vmax.f32 %v1125, 0.0
        %v1166 = vmax.f32 %v1126, 0.0
        %v1167 = vmax.f32 %v1127, 0.0
        %v1168 = vmax.f32 %v1128, 0.0
        %v1169 = vmax.f32 %v1129, 0.0
        %v1170 = vmax.f32 %v1130, 0.0
        %v1171 = vmax.f32 %v1131, 0.0
        %v1172 = vmax.f32 %v1132, 0.0
        %v1173 = vmax.f32 %v1133, 0.0
        %v1174 = vmax.f32 %v1134, 0.0
        %v1175 = vmax.f32 %v1135, 0.0
        %v1176 = vmax.f32 %v1136, 0.0
        %v1177 = vmax.f32 %v1137, 0.0
        %v1178 = vmax.f32 %v1138, 0.0
        %v1179 = vmax.f32 %v1139, 0.0
        %v1180 = vmax.f32 %v1140, 0.0
        %v1181 = vld [vmem:[%s6] sm:$0xff]
        %v1182 = vld [vmem:[%s6 + $0x8] sm:$0xff]
        %1184 = vset.pattern.permute.xlu0 0
        %1185 = vperm.xlu0 %1184, %v1181
        %v1186 = vpop.permute.xlu0 %1185
        %1189 = vset.pattern.permute.xlu0 0
        %1190 = vperm.xlu0 %1189, %v1182
        %v1191 = vpop.permute.xlu0 %1190
        %v1193 = vmul.f32 %v1141, %v1186
        %v1194 = vmul.f32 %v1142, %v1186
        %v1195 = vmul.f32 %v1143, %v1186
        %v1196 = vmul.f32 %v1144, %v1186
        %v1197 = vmul.f32 %v1145, %v1191
        %v1198 = vmul.f32 %v1146, %v1191
        %v1199 = vmul.f32 %v1147, %v1191
        %v1200 = vmul.f32 %v1148, %v1191
        %v1201 = vadd.f32 %v1193, %v1197
        %v1202 = vrot.slane %v1201, 4
        %v1203 = vadd.f32 %v1201, %v1202
        %v1204 = vrot.slane %v1203, 2
        %v1205 = vadd.f32 %v1203, %v1204
        %v1206 = vrot.slane %v1205, 1
        %v1207 = vadd.f32 %v1205, %v1206
        %v1208 = vadd.f32 %v1194, %v1198
        %v1209 = vrot.slane %v1208, 4
        %v1210 = vadd.f32 %v1208, %v1209
        %v1211 = vrot.slane %v1210, 2
        %v1212 = vadd.f32 %v1210, %v1211
        %v1213 = vrot.slane %v1212, 1
        %v1214 = vadd.f32 %v1212, %v1213
        %v1215 = vadd.f32 %v1195, %v1199
        %v1216 = vrot.slane %v1215, 4
        %v1217 = vadd.f32 %v1215, %v1216
        %v1218 = vrot.slane %v1217, 2
        %v1219 = vadd.f32 %v1217, %v1218
        %v1220 = vrot.slane %v1219, 1
        %v1221 = vadd.f32 %v1219, %v1220
        %v1222 = vadd.f32 %v1196, %v1200
        %v1223 = vrot.slane %v1222, 4
        %v1224 = vadd.f32 %v1222, %v1223
        %v1225 = vrot.slane %v1224, 2
        %v1226 = vadd.f32 %v1224, %v1225
        %v1227 = vrot.slane %v1226, 1
        %v1228 = vadd.f32 %v1226, %v1227
        %v1229 = vld [vmem:[#allocation2] sm:$0x1]
        %1231 = vset.pattern.permute.xlu0 0
        %1232 = vperm.xlu0 %1231, %v1229
        %v1233 = vpop.permute.xlu0 %1232
        %v1235 = vlaneseq
        %v1236 = vshrl.u32 %v1235, 7
        %v1237 = vsub.s32 0, %v1236
        %v1238 = vrot.slane %v1233, %v1237
        %v1239 = vadd.f32 %v1207, %v1238
        %v1240 = vadd.f32 %v1214, %v1238
        %v1241 = vadd.f32 %v1221, %v1238
        %v1242 = vadd.f32 %v1228, %v1238
        %v1243 = vxor.u32 %v1239, 2147483648
        %v1244 = vxor.u32 %v1240, 2147483648
        %v1245 = vxor.u32 %v1241, 2147483648
        %v1246 = vxor.u32 %v1242, 2147483648
        %v1247 = vmul.f32 %v1243, 1.442695
        %v1248 = vpow.pop %v1247
        %v1249 = vmul.f32 %v1244, 1.442695
        %v1250 = vpow.pop %v1249
        %v1251 = vmul.f32 %v1245, 1.442695
        %v1252 = vpow.pop %v1251
        %v1253 = vmul.f32 %v1246, 1.442695
        %v1254 = vpow.pop %v1253
        %v1255 = vadd.f32 %v1248, 1.0
        %v1256 = vadd.f32 %v1250, 1.0
        %v1257 = vadd.f32 %v1252, 1.0
        %v1258 = vadd.f32 %v1254, 1.0
        %v1259 = vrcp.pop %v1255
        %v1260 = vmul.f32 1.0, %v1259
        %v1261 = vrcp.pop %v1256
        %v1262 = vmul.f32 1.0, %v1261
        %v1263 = vrcp.pop %v1257
        %v1264 = vmul.f32 1.0, %v1263
        %v1265 = vrcp.pop %v1258
        %v1266 = vmul.f32 1.0, %v1265
        %v1267 = vld [vmem:[%s8] sm:$0xff]
        %v1268 = vld [vmem:[%s8 + $0x8] sm:$0xff]
        %v1269 = vld [vmem:[%s8 + $0x10] sm:$0xff]
        %v1270 = vld [vmem:[%s8 + $0x18] sm:$0xff]
        %v1271 = vld [vmem:[%s9] sm:$0xff]
        %v1272 = vld [vmem:[%s9 + $0x8] sm:$0xff]
        %v1273 = vld [vmem:[%s9 + $0x10] sm:$0xff]
        %v1274 = vld [vmem:[%s9 + $0x18] sm:$0xff]
        %1276 = vset.pattern.permute.xlu0 0
        %1277 = vperm.xlu0 %1276, %v1271
        %v1278 = vpop.permute.xlu0 %1277
        %1281 = vset.pattern.permute.xlu0 0
        %1282 = vperm.xlu0 %1281, %v1272
        %v1283 = vpop.permute.xlu0 %1282
        %1286 = vset.pattern.permute.xlu0 0
        %1287 = vperm.xlu0 %1286, %v1273
        %v1288 = vpop.permute.xlu0 %1287
        %1291 = vset.pattern.permute.xlu0 0
        %1292 = vperm.xlu0 %1291, %v1274
        %v1293 = vpop.permute.xlu0 %1292
        %vm1295 = vcmask 523264
        %v1297 = vsel %vm1295, %v1267, 0
        %v1300 = vsel %vm1295, %v1268, 0
        %v1303 = vsel %vm1295, %v1269, 0
        %v1306 = vsel %vm1295, %v1270, 0
        %1308 = vmatprep.subr.mxu0 0.0
        %1309 = vmatpush1.msra.mxu0 0.0
        %1310 = vmatprep.subr.mxu0 0.0
        %1311 = vmatpush1.msra.mxu0 0.0
        %1312 = vmatprep.subr.mxu0 0.0
        %1313 = vmatpush1.msra.mxu0 0.0
        %1314 = vmatprep.subr.mxu0 0.0
        %1315 = vmatpush1.msra.mxu0 0.0
        %1316 = vmatprep.subr.mxu0 0.0
        %1317 = vmatpush1.msra.mxu0 0.0
        %1318 = vmatprep.subr.mxu0 0.0
        %1319 = vmatpush1.msra.mxu0 0.0
        %1320 = vmatprep.subr.mxu0 0.0
        %1321 = vmatpush1.msra.mxu0 0.0
        %1322 = vmatprep.subr.mxu0 0.0
        %1323 = vmatpush1.msra.mxu0 0.0
        %1324 = vmatprep.subr.mxu0 %v1178
        %1325 = vmatpush1.msra.mxu0 %v1177
        %1326 = vmatprep.subr.mxu0 %v1174
        %1327 = vmatpush1.msra.mxu0 %v1173
        %1328 = vmatprep.subr.mxu0 %v1170
        %1329 = vmatpush1.msra.mxu0 %v1169
        %1330 = vmatprep.subr.mxu0 %v1166
        %1331 = vmatpush1.msra.mxu0 %v1165
        %1332 = vmatprep.subr.mxu0 %v1162
        %1333 = vmatpush1.msra.mxu0 %v1161
        %1334 = vmatprep.subr.mxu0 %v1158
        %1335 = vmatpush1.msra.mxu0 %v1157
        %1336 = vmatprep.subr.mxu0 %v1154
        %1337 = vmatpush1.msra.mxu0 %v1153
        %1338 = vmatprep.subr.mxu0 %v1150
        %1339 = vmatpush1.msra.mxu0 %v1149
        %1340 = vmatprep.subr.mxu0 0.0
        %1341 = vmatpush2.msra.mxu0 0.0
        %1342 = vmatprep.subr.mxu0 0.0
        %1343 = vmatpush2.msra.mxu0 0.0
        %1344 = vmatprep.subr.mxu0 0.0
        %1345 = vmatpush2.msra.mxu0 0.0
        %1346 = vmatprep.subr.mxu0 0.0
        %1347 = vmatpush2.msra.mxu0 0.0
        %1348 = vmatprep.subr.mxu0 0.0
        %1349 = vmatpush2.msra.mxu0 0.0
        %1350 = vmatprep.subr.mxu0 0.0
        %1351 = vmatpush2.msra.mxu0 0.0
        %1352 = vmatprep.subr.mxu0 0.0
        %1353 = vmatpush2.msra.mxu0 0.0
        %1354 = vmatprep.subr.mxu0 0.0
        %1355 = vmatpush2.msra.mxu0 0.0
        %1356 = vmatprep.subr.mxu0 0.0
        %1357 = vmatpush2.msra.mxu0 0.0
        %1358 = vmatprep.subr.mxu0 0.0
        %1359 = vmatpush2.msra.mxu0 0.0
        %1360 = vmatprep.subr.mxu0 0.0
        %1361 = vmatpush2.msra.mxu0 0.0
        %1362 = vmatprep.subr.mxu0 0.0
        %1363 = vmatpush2.msra.mxu0 0.0
        %1364 = vmatprep.subr.mxu0 0.0
        %1365 = vmatpush2.msra.mxu0 0.0
        %1366 = vmatprep.subr.mxu0 0.0
        %1367 = vmatpush2.msra.mxu0 0.0
        %1368 = vmatprep.subr.mxu0 0.0
        %1369 = vmatpush2.msra.mxu0 0.0
        %1370 = vmatprep.subr.mxu0 0.0
        %1371 = vmatpush2.msra.mxu0 0.0
        %1372 = vmatprep.mubr.f32.mxu0 0.0
        %1373 = vmatmul.mubr.f32.gmra.mxu0 %v1297
        %v1374 = vpop.f32.mrf.mxu0
        %v1375 = vadd.f32 %v1278, %v1374
        %v1376 = vpop.f32.mrf.mxu0
        %v1377 = vadd.f32 %v1278, %v1376
        %1378 = vmatprep.mubr.f32.mxu0 0.0
        %1379 = vmatmul.mubr.f32.gmra.mxu0 %v1300
        %v1380 = vpop.f32.mrf.mxu0
        %v1381 = vadd.f32 %v1283, %v1380
        %v1382 = vpop.f32.mrf.mxu0
        %v1383 = vadd.f32 %v1283, %v1382
        %1384 = vmatprep.mubr.f32.mxu0 0.0
        %1385 = vmatmul.mubr.f32.gmra.mxu0 %v1303
        %v1386 = vpop.f32.mrf.mxu0
        %v1387 = vadd.f32 %v1288, %v1386
        %v1388 = vpop.f32.mrf.mxu0
        %v1389 = vadd.f32 %v1288, %v1388
        %1390 = vmatprep.mubr.f32.mxu0 0.0
        %1391 = vmatmul.mubr.f32.gmra.mxu0 %v1306
        %v1392 = vpop.f32.mrf.mxu0
        %v1393 = vadd.f32 %v1293, %v1392
        %v1394 = vpop.f32.mrf.mxu0
        %v1395 = vadd.f32 %v1293, %v1394
        %1396 = vdwg.mxu0
        %1397 = vmatprep.subr.mxu0 0.0
        %1398 = vmatpush1.msra.mxu0 0.0
        %1399 = vmatprep.subr.mxu0 0.0
        %1400 = vmatpush1.msra.mxu0 0.0
        %1401 = vmatprep.subr.mxu0 0.0
        %1402 = vmatpush1.msra.mxu0 0.0
        %1403 = vmatprep.subr.mxu0 0.0
        %1404 = vmatpush1.msra.mxu0 0.0
        %1405 = vmatprep.subr.mxu0 0.0
        %1406 = vmatpush1.msra.mxu0 0.0
        %1407 = vmatprep.subr.mxu0 0.0
        %1408 = vmatpush1.msra.mxu0 0.0
        %1409 = vmatprep.subr.mxu0 0.0
        %1410 = vmatpush1.msra.mxu0 0.0
        %1411 = vmatprep.subr.mxu0 0.0
        %1412 = vmatpush1.msra.mxu0 0.0
        %1413 = vmatprep.subr.mxu0 %v1180
        %1414 = vmatpush1.msra.mxu0 %v1179
        %1415 = vmatprep.subr.mxu0 %v1176
        %1416 = vmatpush1.msra.mxu0 %v1175
        %1417 = vmatprep.subr.mxu0 %v1172
        %1418 = vmatpush1.msra.mxu0 %v1171
        %1419 = vmatprep.subr.mxu0 %v1168
        %1420 = vmatpush1.msra.mxu0 %v1167
        %1421 = vmatprep.subr.mxu0 %v1164
        %1422 = vmatpush1.msra.mxu0 %v1163
        %1423 = vmatprep.subr.mxu0 %v1160
        %1424 = vmatpush1.msra.mxu0 %v1159
        %1425 = vmatprep.subr.mxu0 %v1156
        %1426 = vmatpush1.msra.mxu0 %v1155
        %1427 = vmatprep.subr.mxu0 %v1152
        %1428 = vmatpush1.msra.mxu0 %v1151
        %1429 = vmatprep.subr.mxu0 0.0
        %1430 = vmatpush2.msra.mxu0 0.0
        %1431 = vmatprep.subr.mxu0 0.0
        %1432 = vmatpush2.msra.mxu0 0.0
        %1433 = vmatprep.subr.mxu0 0.0
        %1434 = vmatpush2.msra.mxu0 0.0
        %1435 = vmatprep.subr.mxu0 0.0
        %1436 = vmatpush2.msra.mxu0 0.0
        %1437 = vmatprep.subr.mxu0 0.0
        %1438 = vmatpush2.msra.mxu0 0.0
        %1439 = vmatprep.subr.mxu0 0.0
        %1440 = vmatpush2.msra.mxu0 0.0
        %1441 = vmatprep.subr.mxu0 0.0
        %1442 = vmatpush2.msra.mxu0 0.0
        %1443 = vmatprep.subr.mxu0 0.0
        %1444 = vmatpush2.msra.mxu0 0.0
        %1445 = vmatprep.subr.mxu0 0.0
        %1446 = vmatpush2.msra.mxu0 0.0
        %1447 = vmatprep.subr.mxu0 0.0
        %1448 = vmatpush2.msra.mxu0 0.0
        %1449 = vmatprep.subr.mxu0 0.0
        %1450 = vmatpush2.msra.mxu0 0.0
        %1451 = vmatprep.subr.mxu0 0.0
        %1452 = vmatpush2.msra.mxu0 0.0
        %1453 = vmatprep.subr.mxu0 0.0
        %1454 = vmatpush2.msra.mxu0 0.0
        %1455 = vmatprep.subr.mxu0 0.0
        %1456 = vmatpush2.msra.mxu0 0.0
        %1457 = vmatprep.subr.mxu0 0.0
        %1458 = vmatpush2.msra.mxu0 0.0
        %1459 = vmatprep.subr.mxu0 0.0
        %1460 = vmatpush2.msra.mxu0 0.0
        %1461 = vmatprep.mubr.f32.mxu0 0.0
        %1462 = vmatmul.mubr.f32.gmra.mxu0 %v1297
        %v1463 = vpop.f32.mrf.mxu0
        %v1464 = vadd.f32 %v1278, %v1463
        %v1465 = vpop.f32.mrf.mxu0
        %v1466 = vadd.f32 %v1278, %v1465
        %1467 = vmatprep.mubr.f32.mxu0 0.0
        %1468 = vmatmul.mubr.f32.gmra.mxu0 %v1300
        %v1469 = vpop.f32.mrf.mxu0
        %v1470 = vadd.f32 %v1283, %v1469
        %v1471 = vpop.f32.mrf.mxu0
        %v1472 = vadd.f32 %v1283, %v1471
        %1473 = vmatprep.mubr.f32.mxu0 0.0
        %1474 = vmatmul.mubr.f32.gmra.mxu0 %v1303
        %v1475 = vpop.f32.mrf.mxu0
        %v1476 = vadd.f32 %v1288, %v1475
        %v1477 = vpop.f32.mrf.mxu0
        %v1478 = vadd.f32 %v1288, %v1477
        %1479 = vmatprep.mubr.f32.mxu0 0.0
        %1480 = vmatmul.mubr.f32.gmra.mxu0 %v1306
        %v1481 = vpop.f32.mrf.mxu0
        %v1482 = vadd.f32 %v1293, %v1481
        %v1483 = vpop.f32.mrf.mxu0
        %v1484 = vadd.f32 %v1293, %v1483
        %1485 = vdwg.mxu0
        %v1486 = vmul.f32 %v586, 0.3
        %v1487 = vmul.f32 %v587, 0.3
        %v1488 = vmul.f32 %v588, 0.3
        %v1489 = vmul.f32 %v589, 0.3
        %v1490 = vadd.f32 %v1260, %v1486
        %v1491 = vadd.f32 %v1262, %v1487
        %v1492 = vadd.f32 %v1264, %v1488
        %v1493 = vadd.f32 %v1266, %v1489
        %vm1494 = vcmp.gt.f32.partialorder %v1490, 0.5
        %vm1495 = vcmp.gt.f32.partialorder %v1491, 0.5
        %vm1496 = vcmp.gt.f32.partialorder %v1492, 0.5
        %vm1497 = vcmp.gt.f32.partialorder %v1493, 0.5
        %v1498 = vmul.f32 %v1375, 0.5
        %v1499 = vmul.f32 %v1377, 0.5
        %v1500 = vmul.f32 %v1464, 0.5
        %v1501 = vmul.f32 %v1466, 0.5
        %v1502 = vmul.f32 %v1381, 0.5
        %v1503 = vmul.f32 %v1383, 0.5
        %v1504 = vmul.f32 %v1470, 0.5
        %v1505 = vmul.f32 %v1472, 0.5
        %v1506 = vmul.f32 %v1387, 0.5
        %v1507 = vmul.f32 %v1389, 0.5
        %v1508 = vmul.f32 %v1476, 0.5
        %v1509 = vmul.f32 %v1478, 0.5
        %v1510 = vmul.f32 %v1393, 0.5
        %v1511 = vmul.f32 %v1395, 0.5
        %v1512 = vmul.f32 %v1482, 0.5
        %v1513 = vmul.f32 %v1484, 0.5
        %v1514 = vadd.f32 %v462, %v1498
        %v1515 = vadd.f32 %v463, %v1499
        %v1516 = vadd.f32 %v464, %v1500
        %v1517 = vadd.f32 %v465, %v1501
        %v1518 = vadd.f32 %v466, %v1502
        %v1519 = vadd.f32 %v467, %v1503
        %v1520 = vadd.f32 %v468, %v1504
        %v1521 = vadd.f32 %v469, %v1505
        %v1522 = vadd.f32 %v470, %v1506
        %v1523 = vadd.f32 %v471, %v1507
        %v1524 = vadd.f32 %v472, %v1508
        %v1525 = vadd.f32 %v473, %v1509
        %v1526 = vadd.f32 %v474, %v1510
        %v1527 = vadd.f32 %v475, %v1511
        %v1528 = vadd.f32 %v476, %v1512
        %v1529 = vadd.f32 %v477, %v1513
        %v1530 = vsel %vm1494, 1, 0
        %v1531 = vsel %vm1495, 1, 0
        %v1532 = vsel %vm1496, 1, 0
        %v1533 = vsel %vm1497, 1, 0
        %vm1534 = vcmp.eq.s32.totalorder %v1530, 1
        %vm1535 = vcmp.eq.s32.totalorder %v1531, 1
        %vm1536 = vcmp.eq.s32.totalorder %v1532, 1
        %vm1537 = vcmp.eq.s32.totalorder %v1533, 1
        %v1538 = vsel %vm1534, %v1514, %v462
        %v1539 = vsel %vm1535, %v1515, %v463
        %v1540 = vsel %vm1536, %v1516, %v464
        %v1541 = vsel %vm1537, %v1517, %v465
        %v1542 = vsel %vm1534, %v1518, %v466
        %v1543 = vsel %vm1535, %v1519, %v467
        %v1544 = vsel %vm1536, %v1520, %v468
        %v1545 = vsel %vm1537, %v1521, %v469
        %v1546 = vsel %vm1534, %v1522, %v470
        %v1547 = vsel %vm1535, %v1523, %v471
        %v1548 = vsel %vm1536, %v1524, %v472
        %v1549 = vsel %vm1537, %v1525, %v473
        %v1550 = vsel %vm1534, %v1526, %v474
        %v1551 = vsel %vm1535, %v1527, %v475
        %v1552 = vsel %vm1536, %v1528, %v476
        %v1553 = vsel %vm1537, %v1529, %v477
        %1554 = vst [vmem:[%s449] sm:$0xff] %v1538
        %1555 = vst [vmem:[%s449 + $0x8] sm:$0xff] %v1539
        %1556 = vst [vmem:[%s449 + $0x10] sm:$0xff] %v1540
        %1557 = vst [vmem:[%s449 + $0x18] sm:$0xff] %v1541
        %1558 = vst [vmem:[%s449 + $0x20] sm:$0xff] %v1542
        %1559 = vst [vmem:[%s449 + $0x28] sm:$0xff] %v1543
        %1560 = vst [vmem:[%s449 + $0x30] sm:$0xff] %v1544
        %1561 = vst [vmem:[%s449 + $0x38] sm:$0xff] %v1545
        %1562 = vst [vmem:[%s449 + $0x40] sm:$0xff] %v1546
        %1563 = vst [vmem:[%s449 + $0x48] sm:$0xff] %v1547
        %1564 = vst [vmem:[%s449 + $0x50] sm:$0xff] %v1548
        %1565 = vst [vmem:[%s449 + $0x58] sm:$0xff] %v1549
        %1566 = vst [vmem:[%s449 + $0x60] sm:$0xff] %v1550
        %1567 = vst [vmem:[%s449 + $0x68] sm:$0xff] %v1551
        %1568 = vst [vmem:[%s449 + $0x70] sm:$0xff] %v1552
        %1569 = vst [vmem:[%s449 + $0x78] sm:$0xff] %v1553
        %s1570 = sand.u32 %s269, 1
        %s1571 = sand.u32 %s269, 1
        %s1572 = smul.addr %s1571, 128
        %s1573 = scalar_lea.vmem [#allocation4], %s1572
        // Predicated region
        $region84: #{boundary_aware_refinement.1} parent=78 // pred_check
          %p1574 = pneg %p279
        $region85: #{boundary_aware_refinement.1} parent=78 // pred_check_branch
          %1576 = sbr.rel (%p1574) target = $region87
        $region86: #{boundary_aware_refinement.1} parent=78 // pred_region
          %s1577 = smul.u32 4, %s28
          %s1578 = smul.addr %s27, 32
          %s1579 = sadd.s32 %s1577, %s1578
          %s1580 = smul.addr %s1579, 8
          %s1581 = scalar_lea.vmem %s10, %s1580
          // Predicated region
          $region88: #{boundary_aware_refinement.1} parent=86 // pred_check
            _
          $region89: #{boundary_aware_refinement.1} parent=86 // pred_check_branch
            %1583 = sbr.rel (0) target = $region91
          $region90: #{boundary_aware_refinement.1} parent=86 // pred_region
            // Predicated region
            $region92: #{boundary_aware_refinement.1} parent=90 // pred_check
              _
            $region93: #{boundary_aware_refinement.1} parent=90 // pred_check_branch
              %1585 = sbr.rel (0) target = $region95
            $region94: #{boundary_aware_refinement.1} parent=90 // pred_region
              loop: start=0, step=1, limit=1
              $region96: #{boundary_aware_refinement.1} parent=94 // loop_pre_header
                _
              $region97: #{boundary_aware_refinement.1} parent=94 // loop_header
                %s1587 = sphi 0, %s1591
                %p1588 = scmp.ge.s32.totalorder %s1587, 1
                %s1592 = sphi %s1573, %s1573
                %s1593 = sphi %s1581, %s1581
              $region98: #{boundary_aware_refinement.1} parent=94 // loop_header_branch
                %1590 = sbr.rel (%p1588) target = $region102
              $region99: #{boundary_aware_refinement.1} parent=94 // loop_body
                %v1594 = vld [vmem:[%s1592] sm:$0xff]
                %1595 = vst [vmem:[%s1593] sm:$0xff] %v1594
                %v1596 = vld [vmem:[%s1592 + $0x8] sm:$0xff]
                %1597 = vst [vmem:[%s1593 + $0x8] sm:$0xff] %v1596
                %v1598 = vld [vmem:[%s1592 + $0x10] sm:$0xff]
                %1599 = vst [vmem:[%s1593 + $0x10] sm:$0xff] %v1598
                %v1600 = vld [vmem:[%s1592 + $0x18] sm:$0xff]
                %1601 = vst [vmem:[%s1593 + $0x18] sm:$0xff] %v1600
                %v1602 = vld [vmem:[%s1592 + $0x20] sm:$0xff]
                %1603 = vst [vmem:[%s1593 + $0x40] sm:$0xff] %v1602
                %v1604 = vld [vmem:[%s1592 + $0x28] sm:$0xff]
                %1605 = vst [vmem:[%s1593 + $0x48] sm:$0xff] %v1604
                %v1606 = vld [vmem:[%s1592 + $0x30] sm:$0xff]
                %1607 = vst [vmem:[%s1593 + $0x50] sm:$0xff] %v1606
                %v1608 = vld [vmem:[%s1592 + $0x38] sm:$0xff]
                %1609 = vst [vmem:[%s1593 + $0x58] sm:$0xff] %v1608
                %v1610 = vld [vmem:[%s1592 + $0x40] sm:$0xff]
                %1611 = vst [vmem:[%s1593 + $0x80] sm:$0xff] %v1610
                %v1612 = vld [vmem:[%s1592 + $0x48] sm:$0xff]
                %1613 = vst [vmem:[%s1593 + $0x88] sm:$0xff] %v1612
                %v1614 = vld [vmem:[%s1592 + $0x50] sm:$0xff]
                %1615 = vst [vmem:[%s1593 + $0x90] sm:$0xff] %v1614
                %v1616 = vld [vmem:[%s1592 + $0x58] sm:$0xff]
                %1617 = vst [vmem:[%s1593 + $0x98] sm:$0xff] %v1616
                %v1618 = vld [vmem:[%s1592 + $0x60] sm:$0xff]
                %1619 = vst [vmem:[%s1593 + $0xc0] sm:$0xff] %v1618
                %v1620 = vld [vmem:[%s1592 + $0x68] sm:$0xff]
                %1621 = vst [vmem:[%s1593 + $0xc8] sm:$0xff] %v1620
                %v1622 = vld [vmem:[%s1592 + $0x70] sm:$0xff]
                %1623 = vst [vmem:[%s1593 + $0xd0] sm:$0xff] %v1622
                %v1624 = vld [vmem:[%s1592 + $0x78] sm:$0xff]
                %1625 = vst [vmem:[%s1593 + $0xd8] sm:$0xff] %v1624
              $region100: #{boundary_aware_refinement.1} parent=94 // loop_footer
                %s1591 = sadd.s32 1, %s1587
              $region101: #{boundary_aware_refinement.1} parent=94 // loop_footer_branch
                %1586 = sbr.rel target = $region97
              $region102: #{boundary_aware_refinement.1} parent=94 // loop_exit
                _
            $region95: #{boundary_aware_refinement.1} parent=90 // pred_fallthru
              _
            // Predicated region
            $region103: #{boundary_aware_refinement.1} parent=90 // pred_check
              _
            $region104: #{boundary_aware_refinement.1} parent=90 // pred_check_branch
              %1627 = sbr.rel target = $region106
            $region105: #{boundary_aware_refinement.1} parent=90 // pred_region
              _
            $region106: #{boundary_aware_refinement.1} parent=90 // pred_fallthru
              _
          $region91: #{boundary_aware_refinement.1} parent=86 // pred_fallthru
            _
          %1628 = vnop
        $region87: #{boundary_aware_refinement.1} parent=78 // pred_fallthru
          _
      $region79: #{boundary_aware_refinement.1} parent=5 // pred_fallthru
        _
      %p1629 = scmp.le.s32.totalorder 2, %s18
      // Predicated region
      $region107: #{boundary_aware_refinement.1} parent=5 // pred_check
        %p1630 = pneg %p1629
      $region108: #{boundary_aware_refinement.1} parent=5 // pred_check_branch
        %1632 = sbr.rel (%p1630) target = $region110
      $region109: #{boundary_aware_refinement.1} parent=5 // pred_region
        %s1633 = ssub.s32 %s18, 2
        // Predicated region
        $region111: #{boundary_aware_refinement.1} parent=109 // pred_check
          %p1634 = pneg %p285
        $region112: #{boundary_aware_refinement.1} parent=109 // pred_check_branch
          %1636 = sbr.rel (%p1634) target = $region114
        $region113: #{boundary_aware_refinement.1} parent=109 // pred_region
          %s1637 = sand.u32 %s270, 1
          %s1638 = sand.u32 %s270, 1
          %s1639 = smul.addr %s1638, 128
          %s1640 = scalar_lea.vmem [#allocation4], %s1639
        $region114: #{boundary_aware_refinement.1} parent=109 // pred_fallthru
          _
      $region110: #{boundary_aware_refinement.1} parent=5 // pred_fallthru
        _
    $region6: #{boundary_aware_refinement.1} parent=1 // loop_footer
      %s22 = sadd.s32 1, %s18
    $region7: #{boundary_aware_refinement.1} parent=1 // loop_footer_branch
      %17 = sbr.rel target = $region3
    $region8: #{boundary_aware_refinement.1} parent=1 // loop_exit
      _

</llo_original>
